<compile_context>
chip_gen: v7x
topology: tpu7x:2x2x1
jax: 0.10.0
libtpu: 0.0.40
codegen_flags: <defaults>
</compile_context>

<pallas_src>
import jax
import jax.numpy as jnp
import numpy as np
from jax.experimental import pallas as pl
from jax.experimental.pallas import tpu as pltpu


def deeppoly_kernel(qdata_ref, w1aug_ref, w1_ref, cslab_ref, out_ref):
    f32 = jnp.float32
    H, D = w1_ref.shape                 # Linear-1: (out, in) = (H, D)
    K = out_ref.shape[1] // 2           # number of classes
    BB = qdata_ref.shape[0]             # queries in this block

    qdata = qdata_ref[...]              # (BB, 2D + H) = [c | r | alpha]
    c = qdata[:, :D]                    # (BB, D) box center
    r = qdata[:, D:2 * D]               # (BB, D) box radius (>= 0)
    alpha = jnp.clip(qdata[:, 2 * D:2 * D + H], 0.0, 1.0)   # (BB, H) lower slopes

    cslab = cslab_ref[...]              # (>=2K+2, H) packed constants
    a_pos = cslab[0:K, :]               # (K, H)  max(cmat@W2, 0)
    a_neg = cslab[K:2 * K, :]           # (K, H)  min(cmat@W2, 0)
    b1 = cslab[2 * K:2 * K + 1, :]      # (1, H)
    c0k = cslab[2 * K + 1:2 * K + 2, :K]   # (1, K)  cmat @ b2

    # (1) Linear-1 concrete pre-activation bounds via ONE canonical MXU dot
    #     against the host-precomputed augmented weight
    #       w1aug2 = [[W1^T, W1^T], [|W1|^T, -|W1|^T]]  of shape (2D, 2H):
    #       [c, r] @ w1aug2 = [ c.W1^T + r.|W1|^T  |  c.W1^T - r.|W1|^T ]
    pre = jnp.dot(qdata[:, :2 * D], w1aug_ref[...],
                  preferred_element_type=f32)                       # (BB, 2H)
    ub1 = pre[:, :H] + b1                                           # (BB, H)
    lb1 = pre[:, H:] + b1                                           # (BB, H)

    # (2) DeepPoly ReLU triangle relaxation coefficients (elementwise, VPU).
    crossing = jnp.logical_and(lb1 < 0.0, ub1 > 0.0)
    denom = jnp.where(crossing, ub1 - lb1, 1.0)
    lam = jnp.where(ub1 <= 0.0, 0.0,
                    jnp.where(lb1 >= 0.0, 1.0, ub1 / denom))        # upper slope
    mu = jnp.where(crossing, -lam * lb1, 0.0)                       # upper offset
    alo = jnp.where(ub1 <= 0.0, 0.0,
                    jnp.where(lb1 >= 0.0, 1.0, alpha))              # lower slope

    # (3)+(4) back-substitute the (precomputed) difference layer through ReLU.
    ap3 = a_pos[None, :, :]             # (1, K, H)
    an3 = a_neg[None, :, :]             # (1, K, H)
    lam3 = lam[:, None, :]              # (BB, 1, H)
    alo3 = alo[:, None, :]
    a_lb = ap3 * alo3 + an3 * lam3      # (BB, K, H)
    a_ub = ap3 * lam3 + an3 * alo3      # (BB, K, H)

    # (5) back-substitute through Linear-1: ONE stacked (2*BB*K, H)@(H, D) dot.
    a_stack = jnp.concatenate([a_lb, a_ub], axis=0).reshape(2 * BB * K, H)
    b_stack = jnp.dot(a_stack, w1_ref[...],
                      preferred_element_type=f32)                   # (2*BB*K, D)
    b_stack = b_stack.reshape(2 * BB, K, D)
    b_lb = b_stack[:BB]                 # (BB, K, D)
    b_ub = b_stack[BB:]                 # (BB, K, D)

    # (6) concretization + constant terms.  Single per-query lhs (c, r, b1, mu)
    #     with the sign folded into the rhs; c/r/mu are per-query so the
    #     contractions are fused VPU multiply + lane reductions (the MXU keeps
    #     exactly the two dots above — no extra small-dot push/drain).
    c3 = c[:, None, :]                  # (BB, 1, D)
    r3 = r[:, None, :]
    b13 = b1[None, :, :]                # (1, 1, H)
    mu3 = mu[:, None, :]                # (BB, 1, H)

    lb = (jnp.sum(b_lb * c3, axis=-1)
          - jnp.sum(jnp.abs(b_lb) * r3, axis=-1)
          + jnp.sum(a_lb * b13, axis=-1)
          + jnp.sum(an3 * mu3, axis=-1)) + c0k                      # (BB, K)
    ub = (jnp.sum(b_ub * c3, axis=-1)
          + jnp.sum(jnp.abs(b_ub) * r3, axis=-1)
          + jnp.sum(a_ub * b13, axis=-1)
          + jnp.sum(ap3 * mu3, axis=-1)) + c0k                      # (BB, K)

    out_ref[:, :K] = lb
    out_ref[:, K:] = ub


def deeppoly_forward_batched(x_batch, eps, w1, b1, w2, b2, true_label,
                             alpha_batch, *, block_b=16):
    """Batched DeepPoly forward: B queries (per-query input box + alpha
    candidate) in ONE pallas_call.  Returns (lb, ub) of shape (B, K): sound
    bounds on (y_true - y_j) per query and class j."""
    H, D = w1.shape
    K = w2.shape[0]
    B = alpha_batch.shape[0]

    # Per-query packed slab: [center | radius | alpha].
    xf = x_batch.reshape(B, -1).astype(jnp.float32)
    lb_in = jnp.clip(xf - eps, 0.0, 1.0)            # clamp(x - eps, 0, 1)
    ub_in = jnp.clip(xf + eps, 0.0, 1.0)            # clamp(x + eps, 0, 1)
    cin = 0.5 * (lb_in + ub_in)
    rin = 0.5 * (ub_in - lb_in)
    qdata = jnp.concatenate([cin, rin, alpha_batch.astype(jnp.float32)], axis=1)

    # Constant augmented Linear-1 weight, contraction-major (host-side, once).
    w1f = w1.astype(jnp.float32)
    w1t = w1f.T                                      # (D, H)
    w1abs_t = jnp.abs(w1f).T
    w1aug2 = jnp.concatenate(
        [jnp.concatenate([w1t, w1t], axis=1),
         jnp.concatenate([w1abs_t, -w1abs_t], axis=1)], axis=0)     # (2D, 2H)

    # FinalLossVerifier: row j of cmat is (e_true - e_j); fold into Linear-2.
    cmat = (jnp.zeros((K, K), jnp.float32).at[:, true_label].set(1.0)
            - jnp.eye(K, dtype=jnp.float32))
    a0 = cmat @ w2.astype(jnp.float32)                               # (K, H)
    c0 = cmat @ b2.astype(jnp.float32)                               # (K,)
    a_pos = jnp.maximum(a0, 0.0)
    a_neg = jnp.minimum(a0, 0.0)
    b1row = b1.reshape(1, H).astype(jnp.float32)
    c0row = jnp.zeros((1, H), jnp.float32).at[0, :K].set(c0)
    rows = 2 * K + 2
    pad = (-rows) % 8
    cslab = jnp.concatenate(
        [a_pos, a_neg, b1row, c0row, jnp.zeros((pad, H), jnp.float32)], axis=0)

    # Pad the query batch to a multiple of the per-block batch.
    Bp = ((B + block_b - 1) // block_b) * block_b
    if Bp != B:
        qdata = jnp.concatenate(
            [qdata, jnp.tile(qdata[:1], (Bp - B, 1))], axis=0)

    out = pl.pallas_call(
        deeppoly_kernel,
        out_shape=jax.ShapeDtypeStruct((Bp, 2 * K), jnp.float32),
        grid_spec=pltpu.PrefetchScalarGridSpec(
            num_scalar_prefetch=0,
            grid=(Bp // block_b,),
            in_specs=[
                # per-query slab: blocked over the query axis
                pl.BlockSpec((block_b, 2 * D + H), lambda i: (i, 0)),
                # constants: same block every step -> stay VMEM-resident
                pl.BlockSpec((2 * D, 2 * H), lambda i: (0, 0)),
                pl.BlockSpec((H, D), lambda i: (0, 0)),
                pl.BlockSpec((cslab.shape[0], H), lambda i: (0, 0)),
            ],
            out_specs=pl.BlockSpec((block_b, 2 * K), lambda i: (i, 0)),
        ),
        compiler_params=pltpu.CompilerParams(
            dimension_semantics=("parallel",)),   # shard queries across TCs (v7x)
    )(qdata, w1aug2, w1f, cslab)

    return out[:B, :K], out[:B, K:]


def deeppoly_reference_single(x_flat, eps, w1, b1, w2, b2, true_label, alpha):
    """Pure-JAX canonical DeepPoly formulation for one query (validation)."""
    H, D = w1.shape
    K = w2.shape[0]
    xr = x_flat.reshape(1, -1).astype(jnp.float32)
    lb_in = jnp.clip(xr - eps, 0.0, 1.0)
    ub_in = jnp.clip(xr + eps, 0.0, 1.0)
    cmat = (jnp.zeros((K, K), jnp.float32).at[:, true_label].set(1.0)
            - jnp.eye(K, dtype=jnp.float32))
    b1r, b2r, alphar = b1.reshape(1, H), b2.reshape(1, K), alpha.reshape(1, H)
    w1t = w1.T
    lb1 = lb_in @ jnp.maximum(w1t, 0) + ub_in @ jnp.minimum(w1t, 0) + b1r
    ub1 = ub_in @ jnp.maximum(w1t, 0) + lb_in @ jnp.minimum(w1t, 0) + b1r
    crossing = (lb1 < 0) & (ub1 > 0)
    denom = jnp.where(crossing, ub1 - lb1, 1.0)
    lam = jnp.where(ub1 <= 0, 0.0, jnp.where(lb1 >= 0, 1.0, ub1 / denom))
    mu = jnp.where(crossing, -lam * lb1, 0.0)
    alo = jnp.where(ub1 <= 0, 0.0, jnp.where(lb1 >= 0, 1.0, alphar))
    A = cmat @ w2
    cc = jnp.sum(cmat * b2r, axis=1, keepdims=True)
    Ap, An = jnp.maximum(A, 0), jnp.minimum(A, 0)
    A_lb, A_ub = Ap * alo + An * lam, Ap * lam + An * alo
    c_lb = cc + jnp.sum(An * mu, axis=1, keepdims=True)
    c_ub = cc + jnp.sum(Ap * mu, axis=1, keepdims=True)
    B_lb, B_ub = A_lb @ w1, A_ub @ w1
    c_lb = c_lb + jnp.sum(A_lb * b1r, axis=1, keepdims=True)
    c_ub = c_ub + jnp.sum(A_ub * b1r, axis=1, keepdims=True)
    lb = jnp.sum(jnp.maximum(B_lb, 0) * lb_in + jnp.minimum(B_lb, 0) * ub_in,
                 axis=1, keepdims=True) + c_lb
    ub = jnp.sum(jnp.maximum(B_ub, 0) * ub_in + jnp.minimum(B_ub, 0) * lb_in,
                 axis=1, keepdims=True) + c_ub
    return lb.reshape(K), ub.reshape(K)


if __name__ == "__main__":
    key = jax.random.PRNGKey(0)
    kx, k1, k2, k3, k4, ka = jax.random.split(key, 6)

    # Small shapes: image (2, 8, 8) -> D=128, hidden H=128, classes K=8.
    Cc, Hs, Ws = 2, 8, 8
    D, Hh, K = Cc * Hs * Ws, 128, 8
    B, BB = 32, 16          # 32 queries, 16 per grid block (step-5 M = 256)
    true_label = 0
    eps = 0.05

    x_batch = jax.random.uniform(kx, (B, Cc, Hs, Ws), dtype=jnp.float32)
    w1 = jax.random.normal(k1, (Hh, D), jnp.float32) / jnp.sqrt(D)
    b1 = jax.random.normal(k2, (Hh,), jnp.float32) * 0.1
    w2 = jax.random.normal(k3, (K, Hh), jnp.float32) / jnp.sqrt(Hh)
    b2 = jax.random.normal(k4, (K,), jnp.float32) * 0.1
    # TODO(synk): exact ReluVerifier alpha-init heuristic is config-dependent
    # and not given; using random candidates in [0,1] (trainable lower slopes).
    alpha_batch = jax.random.uniform(ka, (B, Hh), dtype=jnp.float32)

    lb, ub = deeppoly_forward_batched(x_batch, eps, w1, b1, w2, b2, true_label,
                                      alpha_batch, block_b=BB)
    jax.block_until_ready((lb, ub))

    # Validate against the pure-JAX DeepPoly reference (vmapped over queries).
    x_flat = x_batch.reshape(B, -1)
    ref_fn = jax.vmap(lambda xf, al: deeppoly_reference_single(
        xf, eps, w1, b1, w2, b2, true_label, al))
    lb_ref, ub_ref = ref_fn(x_flat, alpha_batch)
    np.testing.assert_allclose(np.asarray(lb), np.asarray(lb_ref),
                               atol=5e-2, rtol=5e-2)
    np.testing.assert_allclose(np.asarray(ub), np.asarray(ub_ref),
                               atol=5e-2, rtol=5e-2)

    # Soundness spot-check: concrete (y_true - y_j) at sampled box points must
    # lie inside [lb, ub] for those queries.
    for qi in (0, 7, 31):
        lo = jnp.clip(x_flat[qi] - eps, 0.0, 1.0)
        hi = jnp.clip(x_flat[qi] + eps, 0.0, 1.0)
        for i in range(3):
            u = jax.random.uniform(jax.random.PRNGKey(100 + 7 * qi + i), (D,),
                                   dtype=jnp.float32)
            xs = lo + u * (hi - lo)
            y = w2 @ jnp.maximum(w1 @ xs + b1, 0.0) + b2
            d = y[true_label] - y
            assert bool(jnp.all(d >= lb[qi] - 5e-2))
            assert bool(jnp.all(d <= ub[qi] + 5e-2))

    print("KERNEL_OK")
</pallas_src>

<mosaic_0001>
module attributes {stable_mosaic.version = 11 : i64} {
  func.func @deeppoly_kernel(%arg0: i32, %arg1: memref<16x384xf32, #tpu.memory_space<vmem>>, %arg2: memref<256x256xf32, #tpu.memory_space<vmem>>, %arg3: memref<128x128xf32, #tpu.memory_space<vmem>>, %arg4: memref<24x128xf32, #tpu.memory_space<vmem>>, %arg5: memref<16x16xf32, #tpu.memory_space<vmem>>) attributes {dimension_semantics = [#tpu.dimension_semantics<parallel>], iteration_bounds = array<i64: 2>, scalar_prefetch = 0 : i64, scratch_operands = 0 : i64, tpu.core_type = #tpu.core_type<tc>, window_params = [{transform_indices = @transform_0, window_bounds = array<i64: 16, 384>}, {pipeline_mode = #tpu.pipeline_mode<synchronous>, transform_indices = @transform_1, window_bounds = array<i64: 256, 256>}, {pipeline_mode = #tpu.pipeline_mode<synchronous>, transform_indices = @transform_2, window_bounds = array<i64: 128, 128>}, {pipeline_mode = #tpu.pipeline_mode<synchronous>, transform_indices = @transform_3, window_bounds = array<i64: 24, 128>}, {transform_indices = @transform_4, window_bounds = array<i64: 16, 16>}]} {
    %c0 = arith.constant 0 : index
    %c0_0 = arith.constant 0 : index
    %0 = vector.load %arg1[%c0, %c0_0] : memref<16x384xf32, #tpu.memory_space<vmem>>, vector<16x384xf32>
    %1 = vector.extract_strided_slice %0 {offsets = [0, 0], sizes = [16, 128], strides = [1, 1]} : vector<16x384xf32> to vector<16x128xf32>
    %2 = vector.extract_strided_slice %0 {offsets = [0, 128], sizes = [16, 128], strides = [1, 1]} : vector<16x384xf32> to vector<16x128xf32>
    %3 = vector.extract_strided_slice %0 {offsets = [0, 256], sizes = [16, 128], strides = [1, 1]} : vector<16x384xf32> to vector<16x128xf32>
    %cst = arith.constant 0.000000e+00 : f32
    %cst_1 = arith.constant 1.000000e+00 : f32
    %4 = vector.broadcast %cst : f32 to vector<16x128xf32>
    %5 = arith.maximumf %4, %3 : vector<16x128xf32>
    %6 = vector.broadcast %cst_1 : f32 to vector<16x128xf32>
    %7 = arith.minimumf %6, %5 : vector<16x128xf32>
    %c0_2 = arith.constant 0 : index
    %c0_3 = arith.constant 0 : index
    %8 = vector.load %arg4[%c0_2, %c0_3] : memref<24x128xf32, #tpu.memory_space<vmem>>, vector<24x128xf32>
    %9 = vector.extract_strided_slice %8 {offsets = [0, 0], sizes = [8, 128], strides = [1, 1]} : vector<24x128xf32> to vector<8x128xf32>
    %10 = vector.extract_strided_slice %8 {offsets = [8, 0], sizes = [8, 128], strides = [1, 1]} : vector<24x128xf32> to vector<8x128xf32>
    %11 = vector.extract_strided_slice %8 {offsets = [16, 0], sizes = [1, 128], strides = [1, 1]} : vector<24x128xf32> to vector<1x128xf32>
    %12 = vector.extract_strided_slice %8 {offsets = [17, 0], sizes = [1, 8], strides = [1, 1]} : vector<24x128xf32> to vector<1x8xf32>
    %13 = vector.extract_strided_slice %0 {offsets = [0, 0], sizes = [16, 256], strides = [1, 1]} : vector<16x384xf32> to vector<16x256xf32>
    %c0_4 = arith.constant 0 : index
    %c0_5 = arith.constant 0 : index
    %14 = vector.load %arg2[%c0_4, %c0_5] : memref<256x256xf32, #tpu.memory_space<vmem>>, vector<256x256xf32>
    %cst_6 = arith.constant dense<0.000000e+00> : vector<16x256xf32>
    %15 = tpu.matmul %13, %14, %cst_6 {dimension_numbers = #tpu.dot_dimension_numbers<[1], [0], [0], [1], [0, 0, 1, 1], [], []>} : vector<16x256xf32>, vector<256x256xf32>, vector<16x256xf32> -> vector<16x256xf32>
    %16 = vector.extract_strided_slice %15 {offsets = [0, 0], sizes = [16, 128], strides = [1, 1]} : vector<16x256xf32> to vector<16x128xf32>
    %17 = vector.broadcast %11 : vector<1x128xf32> to vector<16x128xf32>
    %18 = arith.addf %16, %17 : vector<16x128xf32>
    %19 = vector.extract_strided_slice %15 {offsets = [0, 128], sizes = [16, 128], strides = [1, 1]} : vector<16x256xf32> to vector<16x128xf32>
    %20 = vector.broadcast %11 : vector<1x128xf32> to vector<16x128xf32>
    %21 = arith.addf %19, %20 : vector<16x128xf32>
    %cst_7 = arith.constant 0.000000e+00 : f32
    %22 = vector.broadcast %cst_7 : f32 to vector<16x128xf32>
    %23 = arith.cmpf olt, %21, %22 : vector<16x128xf32>
    %cst_8 = arith.constant 0.000000e+00 : f32
    %24 = vector.broadcast %cst_8 : f32 to vector<16x128xf32>
    %25 = arith.cmpf ogt, %18, %24 : vector<16x128xf32>
    %26 = arith.andi %23, %25 : vector<16x128xi1>
    %27 = arith.subf %18, %21 : vector<16x128xf32>
    %cst_9 = arith.constant 1.000000e+00 : f32
    %28 = vector.broadcast %cst_9 : f32 to vector<16x128xf32>
    %29 = arith.select %26, %27, %28 : vector<16x128xi1>, vector<16x128xf32>
    %cst_10 = arith.constant 0.000000e+00 : f32
    %30 = vector.broadcast %cst_10 : f32 to vector<16x128xf32>
    %31 = arith.cmpf ole, %18, %30 : vector<16x128xf32>
    %cst_11 = arith.constant 0.000000e+00 : f32
    %32 = vector.broadcast %cst_11 : f32 to vector<16x128xf32>
    %33 = arith.cmpf oge, %21, %32 : vector<16x128xf32>
    %34 = arith.divf %18, %29 : vector<16x128xf32>
    %cst_12 = arith.constant 1.000000e+00 : f32
    %35 = vector.broadcast %cst_12 : f32 to vector<16x128xf32>
    %36 = arith.select %33, %35, %34 : vector<16x128xi1>, vector<16x128xf32>
    %cst_13 = arith.constant 0.000000e+00 : f32
    %37 = vector.broadcast %cst_13 : f32 to vector<16x128xf32>
    %38 = arith.select %31, %37, %36 : vector<16x128xi1>, vector<16x128xf32>
    %cst_14 = arith.constant 0.000000e+00 : f32
    %39 = vector.broadcast %cst_14 : f32 to vector<16x128xf32>
    %40 = arith.subf %39, %38 : vector<16x128xf32>
    %41 = arith.mulf %40, %21 : vector<16x128xf32>
    %cst_15 = arith.constant 0.000000e+00 : f32
    %42 = vector.broadcast %cst_15 : f32 to vector<16x128xf32>
    %43 = arith.select %26, %41, %42 : vector<16x128xi1>, vector<16x128xf32>
    %cst_16 = arith.constant 0.000000e+00 : f32
    %44 = vector.broadcast %cst_16 : f32 to vector<16x128xf32>
    %45 = arith.cmpf ole, %18, %44 : vector<16x128xf32>
    %cst_17 = arith.constant 0.000000e+00 : f32
    %46 = vector.broadcast %cst_17 : f32 to vector<16x128xf32>
    %47 = arith.cmpf oge, %21, %46 : vector<16x128xf32>
    %cst_18 = arith.constant 1.000000e+00 : f32
    %48 = vector.broadcast %cst_18 : f32 to vector<16x128xf32>
    %49 = arith.select %47, %48, %7 : vector<16x128xi1>, vector<16x128xf32>
    %cst_19 = arith.constant 0.000000e+00 : f32
    %50 = vector.broadcast %cst_19 : f32 to vector<16x128xf32>
    %51 = arith.select %45, %50, %49 : vector<16x128xi1>, vector<16x128xf32>
    %52 = vector.shape_cast %9 : vector<8x128xf32> to vector<1x8x128xf32>
    %53 = vector.shape_cast %10 : vector<8x128xf32> to vector<1x8x128xf32>
    %54 = vector.shape_cast %38 : vector<16x128xf32> to vector<16x1x128xf32>
    %55 = vector.shape_cast %51 : vector<16x128xf32> to vector<16x1x128xf32>
    %56 = vector.broadcast %52 : vector<1x8x128xf32> to vector<16x8x128xf32>
    %57 = vector.broadcast %55 : vector<16x1x128xf32> to vector<16x8x128xf32>
    %58 = arith.mulf %56, %57 : vector<16x8x128xf32>
    %59 = vector.broadcast %53 : vector<1x8x128xf32> to vector<16x8x128xf32>
    %60 = vector.broadcast %54 : vector<16x1x128xf32> to vector<16x8x128xf32>
    %61 = arith.mulf %59, %60 : vector<16x8x128xf32>
    %62 = arith.addf %58, %61 : vector<16x8x128xf32>
    %63 = vector.broadcast %52 : vector<1x8x128xf32> to vector<16x8x128xf32>
    %64 = vector.broadcast %54 : vector<16x1x128xf32> to vector<16x8x128xf32>
    %65 = arith.mulf %63, %64 : vector<16x8x128xf32>
    %66 = vector.broadcast %53 : vector<1x8x128xf32> to vector<16x8x128xf32>
    %67 = vector.broadcast %55 : vector<16x1x128xf32> to vector<16x8x128xf32>
    %68 = arith.mulf %66, %67 : vector<16x8x128xf32>
    %69 = arith.addf %65, %68 : vector<16x8x128xf32>
    %70 = tpu.concatenate %62, %69 in 0 : vector<16x8x128xf32>, vector<16x8x128xf32> -> vector<32x8x128xf32>
    %71 = vector.shape_cast %70 : vector<32x8x128xf32> to vector<256x128xf32>
    %c0_20 = arith.constant 0 : index
    %c0_21 = arith.constant 0 : index
    %72 = vector.load %arg3[%c0_20, %c0_21] : memref<128x128xf32, #tpu.memory_space<vmem>>, vector<128x128xf32>
    %cst_22 = arith.constant dense<0.000000e+00> : vector<256x128xf32>
    %73 = tpu.matmul %71, %72, %cst_22 {dimension_numbers = #tpu.dot_dimension_numbers<[1], [0], [0], [1], [0, 0, 1, 1], [], []>} : vector<256x128xf32>, vector<128x128xf32>, vector<256x128xf32> -> vector<256x128xf32>
    %74 = vector.shape_cast %73 : vector<256x128xf32> to vector<32x8x128xf32>
    %75 = vector.extract_strided_slice %74 {offsets = [0, 0, 0], sizes = [16, 8, 128], strides = [1, 1, 1]} : vector<32x8x128xf32> to vector<16x8x128xf32>
    %76 = vector.extract_strided_slice %74 {offsets = [16, 0, 0], sizes = [16, 8, 128], strides = [1, 1, 1]} : vector<32x8x128xf32> to vector<16x8x128xf32>
    %77 = vector.shape_cast %1 : vector<16x128xf32> to vector<16x1x128xf32>
    %78 = vector.shape_cast %2 : vector<16x128xf32> to vector<16x1x128xf32>
    %79 = vector.shape_cast %11 : vector<1x128xf32> to vector<1x1x128xf32>
    %80 = vector.shape_cast %43 : vector<16x128xf32> to vector<16x1x128xf32>
    %81 = vector.broadcast %77 : vector<16x1x128xf32> to vector<16x8x128xf32>
    %82 = arith.mulf %75, %81 : vector<16x8x128xf32>
    %cst_23 = arith.constant dense<0.000000e+00> : vector<16x8xf32>
    %83 = vector.multi_reduction <add>, %82, %cst_23 [2] : vector<16x8x128xf32> to vector<16x8xf32>
    %84 = math.absf %75 : vector<16x8x128xf32>
    %85 = vector.broadcast %78 : vector<16x1x128xf32> to vector<16x8x128xf32>
    %86 = arith.mulf %84, %85 : vector<16x8x128xf32>
    %cst_24 = arith.constant dense<0.000000e+00> : vector<16x8xf32>
    %87 = vector.multi_reduction <add>, %86, %cst_24 [2] : vector<16x8x128xf32> to vector<16x8xf32>
    %88 = arith.subf %83, %87 : vector<16x8xf32>
    %89 = vector.broadcast %79 : vector<1x1x128xf32> to vector<16x8x128xf32>
    %90 = arith.mulf %62, %89 : vector<16x8x128xf32>
    %cst_25 = arith.constant dense<0.000000e+00> : vector<16x8xf32>
    %91 = vector.multi_reduction <add>, %90, %cst_25 [2] : vector<16x8x128xf32> to vector<16x8xf32>
    %92 = arith.addf %88, %91 : vector<16x8xf32>
    %93 = vector.broadcast %53 : vector<1x8x128xf32> to vector<16x8x128xf32>
    %94 = vector.broadcast %80 : vector<16x1x128xf32> to vector<16x8x128xf32>
    %95 = arith.mulf %93, %94 : vector<16x8x128xf32>
    %cst_26 = arith.constant dense<0.000000e+00> : vector<16x8xf32>
    %96 = vector.multi_reduction <add>, %95, %cst_26 [2] : vector<16x8x128xf32> to vector<16x8xf32>
    %97 = arith.addf %92, %96 : vector<16x8xf32>
    %98 = vector.broadcast %12 : vector<1x8xf32> to vector<16x8xf32>
    %99 = arith.addf %97, %98 : vector<16x8xf32>
    %100 = vector.broadcast %77 : vector<16x1x128xf32> to vector<16x8x128xf32>
    %101 = arith.mulf %76, %100 : vector<16x8x128xf32>
    %cst_27 = arith.constant dense<0.000000e+00> : vector<16x8xf32>
    %102 = vector.multi_reduction <add>, %101, %cst_27 [2] : vector<16x8x128xf32> to vector<16x8xf32>
    %103 = math.absf %76 : vector<16x8x128xf32>
    %104 = vector.broadcast %78 : vector<16x1x128xf32> to vector<16x8x128xf32>
    %105 = arith.mulf %103, %104 : vector<16x8x128xf32>
    %cst_28 = arith.constant dense<0.000000e+00> : vector<16x8xf32>
    %106 = vector.multi_reduction <add>, %105, %cst_28 [2] : vector<16x8x128xf32> to vector<16x8xf32>
    %107 = arith.addf %102, %106 : vector<16x8xf32>
    %108 = vector.broadcast %79 : vector<1x1x128xf32> to vector<16x8x128xf32>
    %109 = arith.mulf %69, %108 : vector<16x8x128xf32>
    %cst_29 = arith.constant dense<0.000000e+00> : vector<16x8xf32>
    %110 = vector.multi_reduction <add>, %109, %cst_29 [2] : vector<16x8x128xf32> to vector<16x8xf32>
    %111 = arith.addf %107, %110 : vector<16x8xf32>
    %112 = vector.broadcast %52 : vector<1x8x128xf32> to vector<16x8x128xf32>
    %113 = vector.broadcast %80 : vector<16x1x128xf32> to vector<16x8x128xf32>
    %114 = arith.mulf %112, %113 : vector<16x8x128xf32>
    %cst_30 = arith.constant dense<0.000000e+00> : vector<16x8xf32>
    %115 = vector.multi_reduction <add>, %114, %cst_30 [2] : vector<16x8x128xf32> to vector<16x8xf32>
    %116 = arith.addf %111, %115 : vector<16x8xf32>
    %117 = vector.broadcast %12 : vector<1x8xf32> to vector<16x8xf32>
    %118 = arith.addf %116, %117 : vector<16x8xf32>
    %c0_31 = arith.constant 0 : index
    %c0_32 = arith.constant 0 : index
    %119 = vector.load %arg5[%c0_31, %c0_32] : memref<16x16xf32, #tpu.memory_space<vmem>>, vector<16x8xf32>
    tpu.vector_store %arg5[%c0_31, %c0_32], %99 {strides = array<i32>} : memref<16x16xf32, #tpu.memory_space<vmem>>, vector<16x8xf32>,
    %c0_33 = arith.constant 0 : index
    %c8 = arith.constant 8 : index
    %120 = vector.load %arg5[%c0_33, %c8] : memref<16x16xf32, #tpu.memory_space<vmem>>, vector<16x8xf32>
    tpu.vector_store %arg5[%c0_33, %c8], %118 {strides = array<i32>} : memref<16x16xf32, #tpu.memory_space<vmem>>, vector<16x8xf32>,
    return
  }
  func.func @transform_0(%arg0: i32) -> (i32, i32) {
    %c0_i32 = arith.constant 0 : i32
    %c0_i32_0 = arith.constant 0 : i32
    return %arg0, %c0_i32 : i32, i32
  }
  func.func @transform_1(%arg0: i32) -> (i32, i32) {
    %c0_i32 = arith.constant 0 : i32
    %c0_i32_0 = arith.constant 0 : i32
    %c0_i32_1 = arith.constant 0 : i32
    return %c0_i32, %c0_i32_0 : i32, i32
  }
  func.func @transform_2(%arg0: i32) -> (i32, i32) {
    %c0_i32 = arith.constant 0 : i32
    %c0_i32_0 = arith.constant 0 : i32
    %c0_i32_1 = arith.constant 0 : i32
    return %c0_i32, %c0_i32_0 : i32, i32
  }
  func.func @transform_3(%arg0: i32) -> (i32, i32) {
    %c0_i32 = arith.constant 0 : i32
    %c0_i32_0 = arith.constant 0 : i32
    %c0_i32_1 = arith.constant 0 : i32
    return %c0_i32, %c0_i32_0 : i32, i32
  }
  func.func @transform_4(%arg0: i32) -> (i32, i32) {
    %c0_i32 = arith.constant 0 : i32
    %c0_i32_0 = arith.constant 0 : i32
    return %arg0, %c0_i32 : i32, i32
  }
}

</mosaic_0001>

<llo_original>
// kernel: tpu_custom_call.1
$region0: #{tpu_custom_call.1}
  #allocation0 [shape = 'u32[]', space=smem, size = 0x4, offset = 0x4, fixed_abs, tag = 'smem constant byte address 0x4 - core index']
  #allocation1 [shape = 'u32[144,128]{1,0:T(1,128)}', space=vmem, size = 0x12000, scoped, tag = 'internal scratch']
  %s0 = inlined_call_operand.hbm [shape: f32[32,384], index: 0, kind: input, shape index: {}]
  %s1 = inlined_call_operand.hbm [shape: f32[256,256], index: 1, kind: input, shape index: {}]
  %s2 = inlined_call_operand.hbm [shape: f32[128,128], index: 2, kind: input, shape index: {}]
  %s3 = inlined_call_operand.hbm [shape: f32[24,128], index: 3, kind: input, shape index: {}]
  %s4 = inlined_call_operand.vmem [shape: f32[32,16], index: 4, kind: output, shape index: {}]
  %s5 = sld [smem:[#allocation0]]
  $region65: #{tpu_custom_call.1} parent=0
    _
  %s7 = ssub.s32 1, %s5
  %s8 = scalar_select 0, %s7, %s5
  $region1: #{tpu_custom_call.1} parent=0
    #allocation2 [shape = 'u8[49152]{0}', space=vmem, size = 0xc000, scoped, tag = 'input window, operand 0']
    #allocation3 [shape = 's32[2]{0}', space=sflag, size = 0x8, scoped, tag = 'scoped memory for tpu_custom_call.1']
    #allocation4 [shape = 'u8[262144]{0}', space=vmem, size = 0x40000, scoped, tag = 'input window, operand 1, single buffered']
    #allocation5 [shape = 's32[1]{0}', space=sflag, size = 0x4, scoped, tag = 'scoped memory for tpu_custom_call.1']
    #allocation6 [shape = 'u8[65536]{0}', space=vmem, size = 0x10000, scoped, tag = 'input window, operand 2, single buffered']
    #allocation7 [shape = 'u8[12288]{0}', space=vmem, size = 0x3000, scoped, tag = 'input window, operand 3, single buffered']
    #allocation8 [shape = 's32[1]{0}', space=sflag, size = 0x4, scoped, tag = 'scoped memory for tpu_custom_call.1']
    %9 = vsyncpa [#allocation3], 0
    %s10 = scalar_lea.sflag [#allocation3], 1
    %11 = vsyncpa %s10, 0
    %12 = vsyncpa [#allocation5], 0
    %13 = vsyncpa [#allocation8], 0
    loop: start=0, step=1, limit=4
    $region2: #{tpu_custom_call.1} parent=1 // loop_pre_header
      _
    $region3: #{tpu_custom_call.1} parent=1 // loop_header
      %s15 = sphi 0, %s19
      %p16 = scmp.ge.s32.totalorder %s15, 4
      %s25 = sphi 0, %s27
      %s28 = sphi 0, %s25
      %s29 = sphi 0, %s28
      %s45 = sphi 0, %s29
      %s49 = sphi 0, %s49
      %s51 = sphi 0, %s49
      %s52 = sphi 0, %s51
      %s66 = sphi 0, %s52
      %s70 = sphi 0, %s70
      %s72 = sphi 0, %s70
      %s73 = sphi 0, %s72
      %s87 = sphi 0, %s73
      %s91 = sphi 0, %s91
      %s93 = sphi 0, %s91
      %s94 = sphi 0, %s93
      %s108 = sphi 0, %s94
      %s114 = sphi 0, %s116
      %s117 = sphi 0, %s114
      %s118 = sphi 0, %s117
      %s134 = sphi 0, %s118
    $region4: #{tpu_custom_call.1} parent=1 // loop_header_branch
      %18 = sbr.rel (%p16) target = $region8
    $region5: #{tpu_custom_call.1} parent=1 // loop_body
      %s20 = ssub.s32 %s15, 1
      %s21 = ssub.s32 %s15, 2
      %s22 = sadd.s32 %s15, 1
      %s23 = ssub.s32 %s15, %s22
      %p24 = scmp.eq.s32.totalorder %s23, 0
      %s26 = sadd.s32 %s25, 1
      %s27 = scalar_select %p24, %s25, %s26
      %p30 = pneg %p24
      %p31 = scmp.eq.s32.totalorder %s15, 1
      %p32 = por %p30, %p31
      %p33 = scmp.ne.s32.totalorder %s25, %s28
      %p34 = scmp.eq.s32.totalorder %s15, 0
      %p35 = por %p33, %p34
      %p36 = scmp.ne.s32.totalorder %s25, %s28
      %p37 = scmp.eq.s32.totalorder %s20, 1
      %p38 = por %p36, %p37
      %p39 = scmp.ne.s32.totalorder %s28, %s29
      %p40 = scmp.eq.s32.totalorder %s20, 0
      %p41 = por %p39, %p40
      %p42 = scmp.ne.s32.totalorder %s28, %s29
      %p43 = scmp.eq.s32.totalorder %s21, 1
      %p44 = por %p42, %p43
      %p46 = scmp.ne.s32.totalorder %s29, %s45
      %p47 = scmp.eq.s32.totalorder %s21, 0
      %p48 = por %p46, %p47
      %s50 = sadd.s32 %s49, 1
      %p53 = scmp.eq.s32.totalorder %s15, 1
      %p54 = scmp.ne.s32.totalorder %s49, %s51
      %p55 = scmp.eq.s32.totalorder %s15, 0
      %p56 = por %p54, %p55
      %p57 = scmp.ne.s32.totalorder %s49, %s51
      %p58 = scmp.eq.s32.totalorder %s20, 1
      %p59 = por %p57, %p58
      %p60 = scmp.ne.s32.totalorder %s51, %s52
      %p61 = scmp.eq.s32.totalorder %s20, 0
      %p62 = por %p60, %p61
      %p63 = scmp.ne.s32.totalorder %s51, %s52
      %p64 = scmp.eq.s32.totalorder %s21, 1
      %p65 = por %p63, %p64
      %p67 = scmp.ne.s32.totalorder %s52, %s66
      %p68 = scmp.eq.s32.totalorder %s21, 0
      %p69 = por %p67, %p68
      %s71 = sadd.s32 %s70, 1
      %p74 = scmp.eq.s32.totalorder %s15, 1
      %p75 = scmp.ne.s32.totalorder %s70, %s72
      %p76 = scmp.eq.s32.totalorder %s15, 0
      %p77 = por %p75, %p76
      %p78 = scmp.ne.s32.totalorder %s70, %s72
      %p79 = scmp.eq.s32.totalorder %s20, 1
      %p80 = por %p78, %p79
      %p81 = scmp.ne.s32.totalorder %s72, %s73
      %p82 = scmp.eq.s32.totalorder %s20, 0
      %p83 = por %p81, %p82
      %p84 = scmp.ne.s32.totalorder %s72, %s73
      %p85 = scmp.eq.s32.totalorder %s21, 1
      %p86 = por %p84, %p85
      %p88 = scmp.ne.s32.totalorder %s73, %s87
      %p89 = scmp.eq.s32.totalorder %s21, 0
      %p90 = por %p88, %p89
      %s92 = sadd.s32 %s91, 1
      %p95 = scmp.eq.s32.totalorder %s15, 1
      %p96 = scmp.ne.s32.totalorder %s91, %s93
      %p97 = scmp.eq.s32.totalorder %s15, 0
      %p98 = por %p96, %p97
      %p99 = scmp.ne.s32.totalorder %s91, %s93
      %p100 = scmp.eq.s32.totalorder %s20, 1
      %p101 = por %p99, %p100
      %p102 = scmp.ne.s32.totalorder %s93, %s94
      %p103 = scmp.eq.s32.totalorder %s20, 0
      %p104 = por %p102, %p103
      %p105 = scmp.ne.s32.totalorder %s93, %s94
      %p106 = scmp.eq.s32.totalorder %s21, 1
      %p107 = por %p105, %p106
      %p109 = scmp.ne.s32.totalorder %s94, %s108
      %p110 = scmp.eq.s32.totalorder %s21, 0
      %p111 = por %p109, %p110
      %s112 = ssub.s32 %s15, %s22
      %p113 = scmp.eq.s32.totalorder %s112, 0
      %s115 = sadd.s32 %s114, 1
      %s116 = scalar_select %p113, %s114, %s115
      %p119 = pneg %p113
      %p120 = scmp.eq.s32.totalorder %s15, 1
      %p121 = por %p119, %p120
      %p122 = scmp.ne.s32.totalorder %s114, %s117
      %p123 = scmp.eq.s32.totalorder %s15, 0
      %p124 = por %p122, %p123
      %p125 = scmp.ne.s32.totalorder %s114, %s117
      %p126 = scmp.eq.s32.totalorder %s20, 1
      %p127 = por %p125, %p126
      %p128 = scmp.ne.s32.totalorder %s117, %s118
      %p129 = scmp.eq.s32.totalorder %s20, 0
      %p130 = por %p128, %p129
      %p131 = scmp.ne.s32.totalorder %s117, %s118
      %p132 = scmp.eq.s32.totalorder %s21, 1
      %p133 = por %p131, %p132
      %p135 = scmp.ne.s32.totalorder %s118, %s134
      %p136 = scmp.eq.s32.totalorder %s21, 0
      %p137 = por %p135, %p136
      %p138 = scmp.le.s32.totalorder 1, %s15
      %p139 = scmp.lt.s32.totalorder %s15, 3
      %p140 = pnand %p138, %p139
      %p141 = pneg %p140
      // Predicated region
      $region9: #{tpu_custom_call.1} parent=5 // pred_check
        _
      $region10: #{tpu_custom_call.1} parent=5 // pred_check_branch
        %143 = sbr.rel (%p140) target = $region12
      $region11: #{tpu_custom_call.1} parent=5 // pred_region
        %s144 = ssub.s32 %s15, 1
        // Predicated region
        $region13: #{tpu_custom_call.1} parent=11 // pred_check
          %p145 = pneg %p62
        $region14: #{tpu_custom_call.1} parent=11 // pred_check_branch
          %147 = sbr.rel (%p145) target = $region16
        $region15: #{tpu_custom_call.1} parent=11 // pred_region
          %s149 = ssub.s32 8192, 8192
          %150 = vsyncadd [#allocation5], %s149
          %s151 = sshll.u32 [#allocation4], 4
          %s152 = int_to_ptr.vmem [resolvable:$true] %s151
          %157 = dma.hbm_to_vmem [thread:$0]  %s1, 8192, %s152, [#allocation5], 256, 256, 16
        $region16: #{tpu_custom_call.1} parent=11 // pred_fallthru
          _
        // Predicated region
        $region17: #{tpu_custom_call.1} parent=11 // pred_check
          %p158 = pneg %p83
        $region18: #{tpu_custom_call.1} parent=11 // pred_check_branch
          %160 = sbr.rel (%p158) target = $region20
        $region19: #{tpu_custom_call.1} parent=11 // pred_region
          %s162 = ssub.s32 2048, 2048
          %163 = vsyncadd [#allocation5], %s162
          %s164 = sshll.u32 [#allocation6], 4
          %s165 = int_to_ptr.vmem [resolvable:$true] %s164
          %170 = dma.hbm_to_vmem [thread:$0]  %s2, 2048, %s165, [#allocation5], 128, 128, 8
        $region20: #{tpu_custom_call.1} parent=11 // pred_fallthru
          _
        // Predicated region
        $region21: #{tpu_custom_call.1} parent=11 // pred_check
          %p171 = pneg %p104
        $region22: #{tpu_custom_call.1} parent=11 // pred_check_branch
          %173 = sbr.rel (%p171) target = $region24
        $region23: #{tpu_custom_call.1} parent=11 // pred_region
          %s175 = ssub.s32 384, 384
          %176 = vsyncadd [#allocation8], %s175
          %s177 = sshll.u32 [#allocation7], 4
          %s178 = int_to_ptr.vmem [resolvable:$true] %s177
          %183 = dma.hbm_to_vmem [thread:$0]  %s3, 384, %s178, [#allocation8], 128, 128, 8
        $region24: #{tpu_custom_call.1} parent=11 // pred_fallthru
          _
      $region12: #{tpu_custom_call.1} parent=5 // pred_fallthru
        _
      %p184 = scmp.lt.s32.totalorder %s15, 2
      // Predicated region
      $region25: #{tpu_custom_call.1} parent=5 // pred_check
        %p185 = pneg %p184
      $region26: #{tpu_custom_call.1} parent=5 // pred_check_branch
        %187 = sbr.rel (%p185) target = $region28
      $region27: #{tpu_custom_call.1} parent=5 // pred_region
        // Predicated region
        $region29: #{tpu_custom_call.1} parent=27 // pred_check
          %p188 = pneg %p35
        $region30: #{tpu_custom_call.1} parent=27 // pred_check_branch
          %190 = sbr.rel (%p188) target = $region32
        $region31: #{tpu_custom_call.1} parent=27 // pred_region
          %s191 = sand.u32 %s25, 1
          %s192 = scalar_lea.sflag [#allocation3], %s191
          %s193 = sand.u32 %s25, 1
          %s194 = smul.addr %s193, 48
          %s195 = scalar_lea.vmem [#allocation2], %s194
          %s196 = smul.u32 2, %s15
          %s198 = ssub.s32 768, 768
          %199 = vsyncadd %s192, %s198
          %s200 = smul.addr %s196, 3
          %s201 = smul.addr %s200, 128
          %s202 = scalar_lea.hbm %s0, %s201
          %s203 = sshll.u32 %s195, 4
          %s204 = int_to_ptr.vmem [resolvable:$true] %s203
          %209 = dma.hbm_to_vmem [thread:$0]  %s202, 768, %s204, %s192, 384, 384, 24
        $region32: #{tpu_custom_call.1} parent=27 // pred_fallthru
          _
      $region28: #{tpu_custom_call.1} parent=5 // pred_fallthru
        _
      %p210 = scmp.le.s32.totalorder 1, %s15
      %p211 = scmp.lt.s32.totalorder %s15, 3
      %p212 = pnand %p210, %p211
      %p213 = pneg %p212
      // Predicated region
      $region33: #{tpu_custom_call.1} parent=5 // pred_check
        _
      $region34: #{tpu_custom_call.1} parent=5 // pred_check_branch
        %215 = sbr.rel (%p212) target = $region36
      $region35: #{tpu_custom_call.1} parent=5 // pred_region
        %s216 = ssub.s32 %s15, 1
        %s217 = sand.u32 %s28, 1
        %s218 = scalar_lea.sflag [#allocation3], %s217
        %s219 = sand.u32 %s28, 1
        %s220 = smul.addr %s219, 48
        %s221 = scalar_lea.vmem [#allocation2], %s220
        // Predicated region
        $region37: #{tpu_custom_call.1} parent=35 // pred_check
          %p222 = pneg %p41
        $region38: #{tpu_custom_call.1} parent=35 // pred_check_branch
          %224 = sbr.rel (%p222) target = $region40
        $region39: #{tpu_custom_call.1} parent=35 // pred_region
          %225 = dma.done %s218, 768
        $region40: #{tpu_custom_call.1} parent=35 // pred_fallthru
          _
        // Predicated region
        $region41: #{tpu_custom_call.1} parent=35 // pred_check
          %p226 = pneg %p62
        $region42: #{tpu_custom_call.1} parent=35 // pred_check_branch
          %228 = sbr.rel (%p226) target = $region44
        $region43: #{tpu_custom_call.1} parent=35 // pred_region
          %229 = dma.done [#allocation5], 8192
        $region44: #{tpu_custom_call.1} parent=35 // pred_fallthru
          _
        // Predicated region
        $region45: #{tpu_custom_call.1} parent=35 // pred_check
          %p230 = pneg %p83
        $region46: #{tpu_custom_call.1} parent=35 // pred_check_branch
          %232 = sbr.rel (%p230) target = $region48
        $region47: #{tpu_custom_call.1} parent=35 // pred_region
          %233 = dma.done [#allocation5], 2048
        $region48: #{tpu_custom_call.1} parent=35 // pred_fallthru
          _
        // Predicated region
        $region49: #{tpu_custom_call.1} parent=35 // pred_check
          %p234 = pneg %p104
        $region50: #{tpu_custom_call.1} parent=35 // pred_check_branch
          %236 = sbr.rel (%p234) target = $region52
        $region51: #{tpu_custom_call.1} parent=35 // pred_region
          %237 = dma.done [#allocation8], 384
        $region52: #{tpu_custom_call.1} parent=35 // pred_fallthru
          _
        %s238 = sand.u32 %s28, 1
        %s239 = scalar_lea.sflag [#allocation3], %s238
        %s240 = sand.u32 %s28, 1
        %s241 = smul.addr %s240, 48
        %s242 = scalar_lea.vmem [#allocation2], %s241
        %p243 = pneg %p41
        %p244 = pneg %p38
        %p245 = pneg %p62
        %p246 = pneg %p59
        %p247 = pneg %p83
        %p248 = pneg %p80
        %p249 = pneg %p104
        %p250 = pneg %p101
        %p251 = pneg %p130
        %p252 = pneg %p127
        %s253 = smul.u32 2, %s20
        %p254 = scmp.lt.s32.totalorder %s253, 3
        %s255 = scalar_select %p254, %s253, 3
        %s256 = smul.addr %s255, 8
        %s257 = scalar_lea.vmem %s4, %s256
        %s258 = smul.u32 2, %s20
        %s259 = smul.u32 2, %s20
        %p260 = scmp.lt.s32.totalorder %s259, 3
        %s261 = scalar_select %p260, %s259, 3
        %s262 = smul.addr %s261, 8
        %s263 = scalar_lea.vmem %s4, %s262
        %s264 = smul.u32 2, %s20
        %v265 = vld [vmem:[%s221] sm:$0xff]
        %v266 = vld [vmem:[%s221 + $0x8] sm:$0xff]
        %v267 = vld [vmem:[%s221 + $0x10] sm:$0xff]
        %v268 = vld [vmem:[%s221 + $0x18] sm:$0xff]
        %v269 = vld [vmem:[%s221 + $0x20] sm:$0xff]
        %v270 = vld [vmem:[%s221 + $0x28] sm:$0xff]
        %v271 = vmax.f32 %v267, 0.0
        %v272 = vmax.f32 %v270, 0.0
        %v273 = vmin.f32 %v271, 1.0
        %v274 = vmin.f32 %v272, 1.0
        %v275 = vld [vmem:[#allocation7] sm:$0xff]
        %v276 = vld [vmem:[#allocation7 + $0x8] sm:$0xff]
        %v277 = vld [vmem:[#allocation7 + $0x10] sm:$0xff]
        %v278 = vld [vmem:[#allocation4] sm:$0xff]
        %v279 = vld [vmem:[#allocation4 + $0x8] sm:$0xff]
        %v280 = vld [vmem:[#allocation4 + $0x10] sm:$0xff]
        %v281 = vld [vmem:[#allocation4 + $0x18] sm:$0xff]
        %v282 = vld [vmem:[#allocation4 + $0x20] sm:$0xff]
        %v283 = vld [vmem:[#allocation4 + $0x28] sm:$0xff]
        %v284 = vld [vmem:[#allocation4 + $0x30] sm:$0xff]
        %v285 = vld [vmem:[#allocation4 + $0x38] sm:$0xff]
        %v286 = vld [vmem:[#allocation4 + $0x40] sm:$0xff]
        %v287 = vld [vmem:[#allocation4 + $0x48] sm:$0xff]
        %v288 = vld [vmem:[#allocation4 + $0x50] sm:$0xff]
        %v289 = vld [vmem:[#allocation4 + $0x58] sm:$0xff]
        %v290 = vld [vmem:[#allocation4 + $0x60] sm:$0xff]
        %v291 = vld [vmem:[#allocation4 + $0x68] sm:$0xff]
        %v292 = vld [vmem:[#allocation4 + $0x70] sm:$0xff]
        %v293 = vld [vmem:[#allocation4 + $0x78] sm:$0xff]
        %v294 = vld [vmem:[#allocation4 + $0x80] sm:$0xff]
        %v295 = vld [vmem:[#allocation4 + $0x88] sm:$0xff]
        %v296 = vld [vmem:[#allocation4 + $0x90] sm:$0xff]
        %v297 = vld [vmem:[#allocation4 + $0x98] sm:$0xff]
        %v298 = vld [vmem:[#allocation4 + $0xa0] sm:$0xff]
        %v299 = vld [vmem:[#allocation4 + $0xa8] sm:$0xff]
        %v300 = vld [vmem:[#allocation4 + $0xb0] sm:$0xff]
        %v301 = vld [vmem:[#allocation4 + $0xb8] sm:$0xff]
        %v302 = vld [vmem:[#allocation4 + $0xc0] sm:$0xff]
        %v303 = vld [vmem:[#allocation4 + $0xc8] sm:$0xff]
        %v304 = vld [vmem:[#allocation4 + $0xd0] sm:$0xff]
        %v305 = vld [vmem:[#allocation4 + $0xd8] sm:$0xff]
        %v306 = vld [vmem:[#allocation4 + $0xe0] sm:$0xff]
        %v307 = vld [vmem:[#allocation4 + $0xe8] sm:$0xff]
        %v308 = vld [vmem:[#allocation4 + $0xf0] sm:$0xff]
        %v309 = vld [vmem:[#allocation4 + $0xf8] sm:$0xff]
        %v310 = vld [vmem:[#allocation4 + $0x100] sm:$0xff]
        %v311 = vld [vmem:[#allocation4 + $0x108] sm:$0xff]
        %v312 = vld [vmem:[#allocation4 + $0x110] sm:$0xff]
        %v313 = vld [vmem:[#allocation4 + $0x118] sm:$0xff]
        %v314 = vld [vmem:[#allocation4 + $0x120] sm:$0xff]
        %v315 = vld [vmem:[#allocation4 + $0x128] sm:$0xff]
        %v316 = vld [vmem:[#allocation4 + $0x130] sm:$0xff]
        %v317 = vld [vmem:[#allocation4 + $0x138] sm:$0xff]
        %v318 = vld [vmem:[#allocation4 + $0x140] sm:$0xff]
        %v319 = vld [vmem:[#allocation4 + $0x148] sm:$0xff]
        %v320 = vld [vmem:[#allocation4 + $0x150] sm:$0xff]
        %v321 = vld [vmem:[#allocation4 + $0x158] sm:$0xff]
        %v322 = vld [vmem:[#allocation4 + $0x160] sm:$0xff]
        %v323 = vld [vmem:[#allocation4 + $0x168] sm:$0xff]
        %v324 = vld [vmem:[#allocation4 + $0x170] sm:$0xff]
        %v325 = vld [vmem:[#allocation4 + $0x178] sm:$0xff]
        %v326 = vld [vmem:[#allocation4 + $0x180] sm:$0xff]
        %v327 = vld [vmem:[#allocation4 + $0x188] sm:$0xff]
        %v328 = vld [vmem:[#allocation4 + $0x190] sm:$0xff]
        %v329 = vld [vmem:[#allocation4 + $0x198] sm:$0xff]
        %v330 = vld [vmem:[#allocation4 + $0x1a0] sm:$0xff]
        %v331 = vld [vmem:[#allocation4 + $0x1a8] sm:$0xff]
        %v332 = vld [vmem:[#allocation4 + $0x1b0] sm:$0xff]
        %v333 = vld [vmem:[#allocation4 + $0x1b8] sm:$0xff]
        %v334 = vld [vmem:[#allocation4 + $0x1c0] sm:$0xff]
        %v335 = vld [vmem:[#allocation4 + $0x1c8] sm:$0xff]
        %v336 = vld [vmem:[#allocation4 + $0x1d0] sm:$0xff]
        %v337 = vld [vmem:[#allocation4 + $0x1d8] sm:$0xff]
        %v338 = vld [vmem:[#allocation4 + $0x1e0] sm:$0xff]
        %v339 = vld [vmem:[#allocation4 + $0x1e8] sm:$0xff]
        %v340 = vld [vmem:[#allocation4 + $0x1f0] sm:$0xff]
        %v341 = vld [vmem:[#allocation4 + $0x1f8] sm:$0xff]
        %342 = vmatprep.subr.mxu0 %v279
        %343 = vmatpush1.msra.mxu0 %v278
        %344 = vmatprep.subr.mxu0 %v281
        %345 = vmatpush1.msra.mxu0 %v280
        %346 = vmatprep.subr.mxu0 %v283
        %347 = vmatpush1.msra.mxu0 %v282
        %348 = vmatprep.subr.mxu0 %v285
        %349 = vmatpush1.msra.mxu0 %v284
        %350 = vmatprep.subr.mxu0 %v287
        %351 = vmatpush1.msra.mxu0 %v286
        %352 = vmatprep.subr.mxu0 %v289
        %353 = vmatpush1.msra.mxu0 %v288
        %354 = vmatprep.subr.mxu0 %v291
        %355 = vmatpush1.msra.mxu0 %v290
        %356 = vmatprep.subr.mxu0 %v293
        %357 = vmatpush1.msra.mxu0 %v292
        %358 = vmatprep.subr.mxu0 %v295
        %359 = vmatpush1.msra.mxu0 %v294
        %360 = vmatprep.subr.mxu0 %v297
        %361 = vmatpush1.msra.mxu0 %v296
        %362 = vmatprep.subr.mxu0 %v299
        %363 = vmatpush1.msra.mxu0 %v298
        %364 = vmatprep.subr.mxu0 %v301
        %365 = vmatpush1.msra.mxu0 %v300
        %366 = vmatprep.subr.mxu0 %v303
        %367 = vmatpush1.msra.mxu0 %v302
        %368 = vmatprep.subr.mxu0 %v305
        %369 = vmatpush1.msra.mxu0 %v304
        %370 = vmatprep.subr.mxu0 %v307
        %371 = vmatpush1.msra.mxu0 %v306
        %372 = vmatprep.subr.mxu0 %v309
        %373 = vmatpush1.msra.mxu0 %v308
        %374 = vmatprep.subr.mxu0 %v311
        %375 = vmatpush1.msra.mxu0 %v310
        %376 = vmatprep.subr.mxu0 %v313
        %377 = vmatpush1.msra.mxu0 %v312
        %378 = vmatprep.subr.mxu0 %v315
        %379 = vmatpush1.msra.mxu0 %v314
        %380 = vmatprep.subr.mxu0 %v317
        %381 = vmatpush1.msra.mxu0 %v316
        %382 = vmatprep.subr.mxu0 %v319
        %383 = vmatpush1.msra.mxu0 %v318
        %384 = vmatprep.subr.mxu0 %v321
        %385 = vmatpush1.msra.mxu0 %v320
        %386 = vmatprep.subr.mxu0 %v323
        %387 = vmatpush1.msra.mxu0 %v322
        %388 = vmatprep.subr.mxu0 %v325
        %389 = vmatpush1.msra.mxu0 %v324
        %390 = vmatprep.subr.mxu0 %v327
        %391 = vmatpush1.msra.mxu0 %v326
        %392 = vmatprep.subr.mxu0 %v329
        %393 = vmatpush1.msra.mxu0 %v328
        %394 = vmatprep.subr.mxu0 %v331
        %395 = vmatpush1.msra.mxu0 %v330
        %396 = vmatprep.subr.mxu0 %v333
        %397 = vmatpush1.msra.mxu0 %v332
        %398 = vmatprep.subr.mxu0 %v335
        %399 = vmatpush1.msra.mxu0 %v334
        %400 = vmatprep.subr.mxu0 %v337
        %401 = vmatpush1.msra.mxu0 %v336
        %402 = vmatprep.subr.mxu0 %v339
        %403 = vmatpush1.msra.mxu0 %v338
        %404 = vmatprep.subr.mxu0 %v341
        %405 = vmatpush1.msra.mxu0 %v340
        %406 = vmatprep.mubr.f32.mxu0 %v266
        %407 = vmatmul.mubr.f32.gmra.mrb[0].mxu0 %v265
        %v408 = vpop.f32.mrb[0].mxu0
        %v409 = vadd.f32 0.0, %v408
        %v410 = vpop.f32.mrb[0].mxu0
        %v411 = vadd.f32 0.0, %v410
        %412 = vmatprep.mubr.f32.mxu0 %v269
        %413 = vmatmul.mubr.f32.gmra.mrb[0].mxu0 %v268
        %v414 = vpop.f32.mrb[0].mxu0
        %v415 = vadd.f32 0.0, %v414
        %v416 = vpop.f32.mrb[0].mxu0
        %v417 = vadd.f32 0.0, %v416
        %418 = vdwg.mxu0
        %v419 = vlaneseq
        %v420 = vshrl.u32 %v419, 7
        %v421 = vsub.s32 0, %v420
        %v422 = vrot.slane %v277, %v421
        %v423 = vadd.f32 %v409, %v422
        %v424 = vadd.f32 %v415, %v422
        %v425 = vadd.f32 %v411, %v422
        %v426 = vadd.f32 %v417, %v422
        %vm427 = vcmp.lt.f32.partialorder %v425, 0.0
        %vm428 = vcmp.lt.f32.partialorder %v426, 0.0
        %vm429 = vcmp.gt.f32.partialorder %v423, 0.0
        %vm430 = vcmp.gt.f32.partialorder %v424, 0.0
        %vm431 = vmand %vm427, %vm429
        %vm432 = vmand %vm428, %vm430
        %v433 = vsub.f32 %v423, %v425
        %v434 = vsub.f32 %v424, %v426
        %v435 = vsel %vm431, %v433, 1.0
        %v436 = vsel %vm432, %v434, 1.0
        %vm437 = vcmp.le.f32.partialorder %v423, 0.0
        %vm438 = vcmp.le.f32.partialorder %v424, 0.0
        %vm439 = vcmp.ge.f32.partialorder %v425, 0.0
        %vm440 = vcmp.ge.f32.partialorder %v426, 0.0
        %v441 = vrcp.pop %v435
        %v442 = vmul.f32 %v423, %v441
        %v443 = vrcp.pop %v436
        %v444 = vmul.f32 %v424, %v443
        %v445 = vsel %vm439, 1.0, %v442
        %v446 = vsel %vm440, 1.0, %v444
        %v447 = vsel %vm437, 0.0, %v445
        %v448 = vsel %vm438, 0.0, %v446
        %v449 = vsub.f32 0.0, %v447
        %v450 = vsub.f32 0.0, %v448
        %v451 = vmul.f32 %v449, %v425
        %v452 = vmul.f32 %v450, %v426
        %v453 = vsel %vm431, %v451, 0.0
        %v454 = vsel %vm432, %v452, 0.0
        %v455 = vsel %vm439, 1.0, %v273
        %v456 = vsel %vm440, 1.0, %v274
        %v457 = vsel %vm437, 0.0, %v455
        %v458 = vsel %vm438, 0.0, %v456
        %v461 = vcombine.high %v447, %v447
        %v463 = vunpack.c.l.s4 1966171168
        %v464 = vunpack.c.0.s8 %v463
        %v465 = vlaneseq
        %v466 = vshrl.u32 %v465, 7
        %v467 = vsub.s32 %v464, %v466
        %v468 = vrot.slane %v447, %v467
        %v470 = vunpack.c.l.s4 1966171168
        %v471 = vunpack.c.0.s8 %v470
        %v472 = vlaneseq
        %v473 = vshrl.u32 %v472, 7
        %v474 = vsub.s32 %v471, %v473
        %v475 = vrot.slane %v461, %v474
        %v476 = vcombine.high %v468, %v468
        %v477 = vcombine.high %v475, %v475
        %v479 = vunpack.c.l.s4 1966171168
        %v480 = vunpack.c.0.s8 %v479
        %v481 = vlaneseq
        %v482 = vshrl.u32 %v481, 7
        %v483 = vsub.s32 %v480, %v482
        %v484 = vrot.slane %v468, %v483
        %v486 = vunpack.c.l.s4 1966171168
        %v487 = vunpack.c.0.s8 %v486
        %v488 = vlaneseq
        %v489 = vshrl.u32 %v488, 7
        %v490 = vsub.s32 %v487, %v489
        %v491 = vrot.slane %v475, %v490
        %v493 = vunpack.c.l.s4 1966171168
        %v494 = vunpack.c.0.s8 %v493
        %v495 = vlaneseq
        %v496 = vshrl.u32 %v495, 7
        %v497 = vsub.s32 %v494, %v496
        %v498 = vrot.slane %v476, %v497
        %v500 = vunpack.c.l.s4 1966171168
        %v501 = vunpack.c.0.s8 %v500
        %v502 = vlaneseq
        %v503 = vshrl.u32 %v502, 7
        %v504 = vsub.s32 %v501, %v503
        %v505 = vrot.slane %v477, %v504
        %v506 = vcombine.high %v484, %v484
        %v507 = vcombine.high %v491, %v491
        %v508 = vcombine.high %v498, %v498
        %v509 = vcombine.high %v505, %v505
        %v510 = vcombine.high %v448, %v448
        %v512 = vunpack.c.l.s4 1966171168
        %v513 = vunpack.c.0.s8 %v512
        %v514 = vlaneseq
        %v515 = vshrl.u32 %v514, 7
        %v516 = vsub.s32 %v513, %v515
        %v517 = vrot.slane %v448, %v516
        %v519 = vunpack.c.l.s4 1966171168
        %v520 = vunpack.c.0.s8 %v519
        %v521 = vlaneseq
        %v522 = vshrl.u32 %v521, 7
        %v523 = vsub.s32 %v520, %v522
        %v524 = vrot.slane %v510, %v523
        %v525 = vcombine.high %v517, %v517
        %v526 = vcombine.high %v524, %v524
        %v528 = vunpack.c.l.s4 1966171168
        %v529 = vunpack.c.0.s8 %v528
        %v530 = vlaneseq
        %v531 = vshrl.u32 %v530, 7
        %v532 = vsub.s32 %v529, %v531
        %v533 = vrot.slane %v517, %v532
        %v535 = vunpack.c.l.s4 1966171168
        %v536 = vunpack.c.0.s8 %v535
        %v537 = vlaneseq
        %v538 = vshrl.u32 %v537, 7
        %v539 = vsub.s32 %v536, %v538
        %v540 = vrot.slane %v524, %v539
        %v542 = vunpack.c.l.s4 1966171168
        %v543 = vunpack.c.0.s8 %v542
        %v544 = vlaneseq
        %v545 = vshrl.u32 %v544, 7
        %v546 = vsub.s32 %v543, %v545
        %v547 = vrot.slane %v525, %v546
        %v549 = vunpack.c.l.s4 1966171168
        %v550 = vunpack.c.0.s8 %v549
        %v551 = vlaneseq
        %v552 = vshrl.u32 %v551, 7
        %v553 = vsub.s32 %v550, %v552
        %v554 = vrot.slane %v526, %v553
        %v555 = vcombine.high %v533, %v533
        %v556 = vcombine.high %v540, %v540
        %v557 = vcombine.high %v547, %v547
        %v558 = vcombine.high %v554, %v554
        %v561 = vcombine.high %v457, %v457
        %v563 = vunpack.c.l.s4 1966171168
        %v564 = vunpack.c.0.s8 %v563
        %v565 = vlaneseq
        %v566 = vshrl.u32 %v565, 7
        %v567 = vsub.s32 %v564, %v566
        %v568 = vrot.slane %v457, %v567
        %v570 = vunpack.c.l.s4 1966171168
        %v571 = vunpack.c.0.s8 %v570
        %v572 = vlaneseq
        %v573 = vshrl.u32 %v572, 7
        %v574 = vsub.s32 %v571, %v573
        %v575 = vrot.slane %v561, %v574
        %v576 = vcombine.high %v568, %v568
        %v577 = vcombine.high %v575, %v575
        %v579 = vunpack.c.l.s4 1966171168
        %v580 = vunpack.c.0.s8 %v579
        %v581 = vlaneseq
        %v582 = vshrl.u32 %v581, 7
        %v583 = vsub.s32 %v580, %v582
        %v584 = vrot.slane %v568, %v583
        %v586 = vunpack.c.l.s4 1966171168
        %v587 = vunpack.c.0.s8 %v586
        %v588 = vlaneseq
        %v589 = vshrl.u32 %v588, 7
        %v590 = vsub.s32 %v587, %v589
        %v591 = vrot.slane %v575, %v590
        %v593 = vunpack.c.l.s4 1966171168
        %v594 = vunpack.c.0.s8 %v593
        %v595 = vlaneseq
        %v596 = vshrl.u32 %v595, 7
        %v597 = vsub.s32 %v594, %v596
        %v598 = vrot.slane %v576, %v597
        %v600 = vunpack.c.l.s4 1966171168
        %v601 = vunpack.c.0.s8 %v600
        %v602 = vlaneseq
        %v603 = vshrl.u32 %v602, 7
        %v604 = vsub.s32 %v601, %v603
        %v605 = vrot.slane %v577, %v604
        %v606 = vcombine.high %v584, %v584
        %v607 = vcombine.high %v591, %v591
        %v608 = vcombine.high %v598, %v598
        %v609 = vcombine.high %v605, %v605
        %v610 = vcombine.high %v458, %v458
        %v612 = vunpack.c.l.s4 1966171168
        %v613 = vunpack.c.0.s8 %v612
        %v614 = vlaneseq
        %v615 = vshrl.u32 %v614, 7
        %v616 = vsub.s32 %v613, %v615
        %v617 = vrot.slane %v458, %v616
        %v619 = vunpack.c.l.s4 1966171168
        %v620 = vunpack.c.0.s8 %v619
        %v621 = vlaneseq
        %v622 = vshrl.u32 %v621, 7
        %v623 = vsub.s32 %v620, %v622
        %v624 = vrot.slane %v610, %v623
        %v625 = vcombine.high %v617, %v617
        %v626 = vcombine.high %v624, %v624
        %v628 = vunpack.c.l.s4 1966171168
        %v629 = vunpack.c.0.s8 %v628
        %v630 = vlaneseq
        %v631 = vshrl.u32 %v630, 7
        %v632 = vsub.s32 %v629, %v631
        %v633 = vrot.slane %v617, %v632
        %v635 = vunpack.c.l.s4 1966171168
        %v636 = vunpack.c.0.s8 %v635
        %v637 = vlaneseq
        %v638 = vshrl.u32 %v637, 7
        %v639 = vsub.s32 %v636, %v638
        %v640 = vrot.slane %v624, %v639
        %v642 = vunpack.c.l.s4 1966171168
        %v643 = vunpack.c.0.s8 %v642
        %v644 = vlaneseq
        %v645 = vshrl.u32 %v644, 7
        %v646 = vsub.s32 %v643, %v645
        %v647 = vrot.slane %v625, %v646
        %v649 = vunpack.c.l.s4 1966171168
        %v650 = vunpack.c.0.s8 %v649
        %v651 = vlaneseq
        %v652 = vshrl.u32 %v651, 7
        %v653 = vsub.s32 %v650, %v652
        %v654 = vrot.slane %v626, %v653
        %v655 = vcombine.high %v633, %v633
        %v656 = vcombine.high %v640, %v640
        %v657 = vcombine.high %v647, %v647
        %v658 = vcombine.high %v654, %v654
        %v659 = vlaneseq
        %v660 = vshrl.u32 %v659, 7
        %v661 = vsub.s32 0, %v660
        %v662 = vrot.slane %v584, %v661
        %v663 = vlaneseq
        %v664 = vshrl.u32 %v663, 7
        %v665 = vsub.s32 0, %v664
        %v666 = vrot.slane %v598, %v665
        %v667 = vlaneseq
        %v668 = vshrl.u32 %v667, 7
        %v669 = vsub.s32 0, %v668
        %v670 = vrot.slane %v606, %v669
        %v671 = vlaneseq
        %v672 = vshrl.u32 %v671, 7
        %v673 = vsub.s32 0, %v672
        %v674 = vrot.slane %v608, %v673
        %v675 = vlaneseq
        %v676 = vshrl.u32 %v675, 7
        %v677 = vsub.s32 0, %v676
        %v678 = vrot.slane %v591, %v677
        %v679 = vlaneseq
        %v680 = vshrl.u32 %v679, 7
        %v681 = vsub.s32 0, %v680
        %v682 = vrot.slane %v605, %v681
        %v683 = vlaneseq
        %v684 = vshrl.u32 %v683, 7
        %v685 = vsub.s32 0, %v684
        %v686 = vrot.slane %v607, %v685
        %v687 = vlaneseq
        %v688 = vshrl.u32 %v687, 7
        %v689 = vsub.s32 0, %v688
        %v690 = vrot.slane %v609, %v689
        %v691 = vlaneseq
        %v692 = vshrl.u32 %v691, 7
        %v693 = vsub.s32 0, %v692
        %v694 = vrot.slane %v633, %v693
        %v695 = vlaneseq
        %v696 = vshrl.u32 %v695, 7
        %v697 = vsub.s32 0, %v696
        %v698 = vrot.slane %v647, %v697
        %v699 = vlaneseq
        %v700 = vshrl.u32 %v699, 7
        %v701 = vsub.s32 0, %v700
        %v702 = vrot.slane %v655, %v701
        %v703 = vlaneseq
        %v704 = vshrl.u32 %v703, 7
        %v705 = vsub.s32 0, %v704
        %v706 = vrot.slane %v657, %v705
        %v707 = vlaneseq
        %v708 = vshrl.u32 %v707, 7
        %v709 = vsub.s32 0, %v708
        %v710 = vrot.slane %v640, %v709
        %v711 = vlaneseq
        %v712 = vshrl.u32 %v711, 7
        %v713 = vsub.s32 0, %v712
        %v714 = vrot.slane %v654, %v713
        %v715 = vlaneseq
        %v716 = vshrl.u32 %v715, 7
        %v717 = vsub.s32 0, %v716
        %v718 = vrot.slane %v656, %v717
        %v719 = vlaneseq
        %v720 = vshrl.u32 %v719, 7
        %v721 = vsub.s32 0, %v720
        %v722 = vrot.slane %v658, %v721
        %v739 = vmul.f32 %v275, %v662
        %v740 = vmul.f32 %v275, %v666
        %v741 = vmul.f32 %v275, %v670
        %v742 = vmul.f32 %v275, %v674
        %v743 = vmul.f32 %v275, %v678
        %v744 = vmul.f32 %v275, %v682
        %v745 = vmul.f32 %v275, %v686
        %v746 = vmul.f32 %v275, %v690
        %v747 = vmul.f32 %v275, %v694
        %v748 = vmul.f32 %v275, %v698
        %v749 = vmul.f32 %v275, %v702
        %v750 = vmul.f32 %v275, %v706
        %v751 = vmul.f32 %v275, %v710
        %v752 = vmul.f32 %v275, %v714
        %v753 = vmul.f32 %v275, %v718
        %v754 = vmul.f32 %v275, %v722
        %v755 = vlaneseq
        %v756 = vshrl.u32 %v755, 7
        %v757 = vsub.s32 0, %v756
        %v758 = vrot.slane %v484, %v757
        %v759 = vlaneseq
        %v760 = vshrl.u32 %v759, 7
        %v761 = vsub.s32 0, %v760
        %v762 = vrot.slane %v498, %v761
        %v763 = vlaneseq
        %v764 = vshrl.u32 %v763, 7
        %v765 = vsub.s32 0, %v764
        %v766 = vrot.slane %v506, %v765
        %v767 = vlaneseq
        %v768 = vshrl.u32 %v767, 7
        %v769 = vsub.s32 0, %v768
        %v770 = vrot.slane %v508, %v769
        %v771 = vlaneseq
        %v772 = vshrl.u32 %v771, 7
        %v773 = vsub.s32 0, %v772
        %v774 = vrot.slane %v491, %v773
        %v775 = vlaneseq
        %v776 = vshrl.u32 %v775, 7
        %v777 = vsub.s32 0, %v776
        %v778 = vrot.slane %v505, %v777
        %v779 = vlaneseq
        %v780 = vshrl.u32 %v779, 7
        %v781 = vsub.s32 0, %v780
        %v782 = vrot.slane %v507, %v781
        %v783 = vlaneseq
        %v784 = vshrl.u32 %v783, 7
        %v785 = vsub.s32 0, %v784
        %v786 = vrot.slane %v509, %v785
        %v787 = vlaneseq
        %v788 = vshrl.u32 %v787, 7
        %v789 = vsub.s32 0, %v788
        %v790 = vrot.slane %v533, %v789
        %v791 = vlaneseq
        %v792 = vshrl.u32 %v791, 7
        %v793 = vsub.s32 0, %v792
        %v794 = vrot.slane %v547, %v793
        %v795 = vlaneseq
        %v796 = vshrl.u32 %v795, 7
        %v797 = vsub.s32 0, %v796
        %v798 = vrot.slane %v555, %v797
        %v799 = vlaneseq
        %v800 = vshrl.u32 %v799, 7
        %v801 = vsub.s32 0, %v800
        %v802 = vrot.slane %v557, %v801
        %v803 = vlaneseq
        %v804 = vshrl.u32 %v803, 7
        %v805 = vsub.s32 0, %v804
        %v806 = vrot.slane %v540, %v805
        %v807 = vlaneseq
        %v808 = vshrl.u32 %v807, 7
        %v809 = vsub.s32 0, %v808
        %v810 = vrot.slane %v554, %v809
        %v811 = vlaneseq
        %v812 = vshrl.u32 %v811, 7
        %v813 = vsub.s32 0, %v812
        %v814 = vrot.slane %v556, %v813
        %v815 = vlaneseq
        %v816 = vshrl.u32 %v815, 7
        %v817 = vsub.s32 0, %v816
        %v818 = vrot.slane %v558, %v817
        %v835 = vmul.f32 %v276, %v758
        %v836 = vmul.f32 %v276, %v762
        %v837 = vmul.f32 %v276, %v766
        %v838 = vmul.f32 %v276, %v770
        %v839 = vmul.f32 %v276, %v774
        %v840 = vmul.f32 %v276, %v778
        %v841 = vmul.f32 %v276, %v782
        %v842 = vmul.f32 %v276, %v786
        %v843 = vmul.f32 %v276, %v790
        %v844 = vmul.f32 %v276, %v794
        %v845 = vmul.f32 %v276, %v798
        %v846 = vmul.f32 %v276, %v802
        %v847 = vmul.f32 %v276, %v806
        %v848 = vmul.f32 %v276, %v810
        %v849 = vmul.f32 %v276, %v814
        %v850 = vmul.f32 %v276, %v818
        %v851 = vadd.f32 %v739, %v835
        %v852 = vadd.f32 %v740, %v836
        %v853 = vadd.f32 %v741, %v837
        %v854 = vadd.f32 %v742, %v838
        %v855 = vadd.f32 %v743, %v839
        %v856 = vadd.f32 %v744, %v840
        %v857 = vadd.f32 %v745, %v841
        %v858 = vadd.f32 %v746, %v842
        %v859 = vadd.f32 %v747, %v843
        %v860 = vadd.f32 %v748, %v844
        %v861 = vadd.f32 %v749, %v845
        %v862 = vadd.f32 %v750, %v846
        %v863 = vadd.f32 %v751, %v847
        %v864 = vadd.f32 %v752, %v848
        %v865 = vadd.f32 %v753, %v849
        %v866 = vadd.f32 %v754, %v850
        %v867 = vmul.f32 %v275, %v758
        %v868 = vmul.f32 %v275, %v762
        %v869 = vmul.f32 %v275, %v766
        %v870 = vmul.f32 %v275, %v770
        %v871 = vmul.f32 %v275, %v774
        %v872 = vmul.f32 %v275, %v778
        %v873 = vmul.f32 %v275, %v782
        %v874 = vmul.f32 %v275, %v786
        %v875 = vmul.f32 %v275, %v790
        %v876 = vmul.f32 %v275, %v794
        %v877 = vmul.f32 %v275, %v798
        %v878 = vmul.f32 %v275, %v802
        %v879 = vmul.f32 %v275, %v806
        %v880 = vmul.f32 %v275, %v810
        %v881 = vmul.f32 %v275, %v814
        %v882 = vmul.f32 %v275, %v818
        %v883 = vmul.f32 %v276, %v662
        %v884 = vmul.f32 %v276, %v666
        %v885 = vmul.f32 %v276, %v670
        %v886 = vmul.f32 %v276, %v674
        %v887 = vmul.f32 %v276, %v678
        %v888 = vmul.f32 %v276, %v682
        %v889 = vmul.f32 %v276, %v686
        %v890 = vmul.f32 %v276, %v690
        %v891 = vmul.f32 %v276, %v694
        %v892 = vmul.f32 %v276, %v698
        %v893 = vmul.f32 %v276, %v702
        %v894 = vmul.f32 %v276, %v706
        %v895 = vmul.f32 %v276, %v710
        %v896 = vmul.f32 %v276, %v714
        %v897 = vmul.f32 %v276, %v718
        %v898 = vmul.f32 %v276, %v722
        %v899 = vadd.f32 %v867, %v883
        %v900 = vadd.f32 %v868, %v884
        %v901 = vadd.f32 %v869, %v885
        %v902 = vadd.f32 %v870, %v886
        %v903 = vadd.f32 %v871, %v887
        %v904 = vadd.f32 %v872, %v888
        %v905 = vadd.f32 %v873, %v889
        %v906 = vadd.f32 %v874, %v890
        %v907 = vadd.f32 %v875, %v891
        %v908 = vadd.f32 %v876, %v892
        %v909 = vadd.f32 %v877, %v893
        %v910 = vadd.f32 %v878, %v894
        %v911 = vadd.f32 %v879, %v895
        %v912 = vadd.f32 %v880, %v896
        %v913 = vadd.f32 %v881, %v897
        %v914 = vadd.f32 %v882, %v898
        %v915 = vld [vmem:[#allocation6] sm:$0xff]
        %v916 = vld [vmem:[#allocation6 + $0x8] sm:$0xff]
        %v917 = vld [vmem:[#allocation6 + $0x10] sm:$0xff]
        %v918 = vld [vmem:[#allocation6 + $0x18] sm:$0xff]
        %v919 = vld [vmem:[#allocation6 + $0x20] sm:$0xff]
        %v920 = vld [vmem:[#allocation6 + $0x28] sm:$0xff]
        %v921 = vld [vmem:[#allocation6 + $0x30] sm:$0xff]
        %v922 = vld [vmem:[#allocation6 + $0x38] sm:$0xff]
        %v923 = vld [vmem:[#allocation6 + $0x40] sm:$0xff]
        %v924 = vld [vmem:[#allocation6 + $0x48] sm:$0xff]
        %v925 = vld [vmem:[#allocation6 + $0x50] sm:$0xff]
        %v926 = vld [vmem:[#allocation6 + $0x58] sm:$0xff]
        %v927 = vld [vmem:[#allocation6 + $0x60] sm:$0xff]
        %v928 = vld [vmem:[#allocation6 + $0x68] sm:$0xff]
        %v929 = vld [vmem:[#allocation6 + $0x70] sm:$0xff]
        %v930 = vld [vmem:[#allocation6 + $0x78] sm:$0xff]
        %931 = vmatprep.subr.mxu0 0.0
        %932 = vmatpush1.msra.mxu0 %v915
        %933 = vmatprep.subr.mxu0 0.0
        %934 = vmatpush1.msra.mxu0 %v916
        %935 = vmatprep.subr.mxu0 0.0
        %936 = vmatpush1.msra.mxu0 %v917
        %937 = vmatprep.subr.mxu0 0.0
        %938 = vmatpush1.msra.mxu0 %v918
        %939 = vmatprep.subr.mxu0 0.0
        %940 = vmatpush1.msra.mxu0 %v919
        %941 = vmatprep.subr.mxu0 0.0
        %942 = vmatpush1.msra.mxu0 %v920
        %943 = vmatprep.subr.mxu0 0.0
        %944 = vmatpush1.msra.mxu0 %v921
        %945 = vmatprep.subr.mxu0 0.0
        %946 = vmatpush1.msra.mxu0 %v922
        %947 = vmatprep.subr.mxu0 0.0
        %948 = vmatpush1.msra.mxu0 %v923
        %949 = vmatprep.subr.mxu0 0.0
        %950 = vmatpush1.msra.mxu0 %v924
        %951 = vmatprep.subr.mxu0 0.0
        %952 = vmatpush1.msra.mxu0 %v925
        %953 = vmatprep.subr.mxu0 0.0
        %954 = vmatpush1.msra.mxu0 %v926
        %955 = vmatprep.subr.mxu0 0.0
        %956 = vmatpush1.msra.mxu0 %v927
        %957 = vmatprep.subr.mxu0 0.0
        %958 = vmatpush1.msra.mxu0 %v928
        %959 = vmatprep.subr.mxu0 0.0
        %960 = vmatpush1.msra.mxu0 %v929
        %961 = vmatprep.subr.mxu0 0.0
        %962 = vmatpush1.msra.mxu0 %v930
        %963 = vmatprep.subr.mxu0 0.0
        %964 = vmatpush1.msra.mxu0 0.0
        %965 = vmatprep.subr.mxu0 0.0
        %966 = vmatpush1.msra.mxu0 0.0
        %967 = vmatprep.subr.mxu0 0.0
        %968 = vmatpush1.msra.mxu0 0.0
        %969 = vmatprep.subr.mxu0 0.0
        %970 = vmatpush1.msra.mxu0 0.0
        %971 = vmatprep.subr.mxu0 0.0
        %972 = vmatpush1.msra.mxu0 0.0
        %973 = vmatprep.subr.mxu0 0.0
        %974 = vmatpush1.msra.mxu0 0.0
        %975 = vmatprep.subr.mxu0 0.0
        %976 = vmatpush1.msra.mxu0 0.0
        %977 = vmatprep.subr.mxu0 0.0
        %978 = vmatpush1.msra.mxu0 0.0
        %979 = vmatprep.subr.mxu0 0.0
        %980 = vmatpush1.msra.mxu0 0.0
        %981 = vmatprep.subr.mxu0 0.0
        %982 = vmatpush1.msra.mxu0 0.0
        %983 = vmatprep.subr.mxu0 0.0
        %984 = vmatpush1.msra.mxu0 0.0
        %985 = vmatprep.subr.mxu0 0.0
        %986 = vmatpush1.msra.mxu0 0.0
        %987 = vmatprep.subr.mxu0 0.0
        %988 = vmatpush1.msra.mxu0 0.0
        %989 = vmatprep.subr.mxu0 0.0
        %990 = vmatpush1.msra.mxu0 0.0
        %991 = vmatprep.subr.mxu0 0.0
        %992 = vmatpush1.msra.mxu0 0.0
        %993 = vmatprep.subr.mxu0 0.0
        %994 = vmatpush1.msra.mxu0 0.0
        %995 = vmatprep.mubr.f32.mxu0 0.0
        %996 = vmatmul.mubr.f32.gmra.mrb[0].mxu0 %v851
        %v997 = vpop.f32.mrb[0].mxu0
        %v998 = vadd.f32 0.0, %v997
        %v999 = vpop.f32.mrb[0].mxu0
        %1000 = vmatprep.mubr.f32.mxu0 0.0
        %1001 = vmatmul.mubr.f32.gmra.mrb[0].mxu0 %v852
        %v1002 = vpop.f32.mrb[0].mxu0
        %v1003 = vadd.f32 0.0, %v1002
        %v1004 = vpop.f32.mrb[0].mxu0
        %1005 = vmatprep.mubr.f32.mxu0 0.0
        %1006 = vmatmul.mubr.f32.gmra.mrb[0].mxu0 %v853
        %v1007 = vpop.f32.mrb[0].mxu0
        %v1008 = vadd.f32 0.0, %v1007
        %v1009 = vpop.f32.mrb[0].mxu0
        %1010 = vmatprep.mubr.f32.mxu0 0.0
        %1011 = vmatmul.mubr.f32.gmra.mrb[0].mxu0 %v854
        %v1012 = vpop.f32.mrb[0].mxu0
        %v1013 = vadd.f32 0.0, %v1012
        %v1014 = vpop.f32.mrb[0].mxu0
        %1015 = vmatprep.mubr.f32.mxu0 0.0
        %1016 = vmatmul.mubr.f32.gmra.mrb[0].mxu0 %v855
        %v1017 = vpop.f32.mrb[0].mxu0
        %v1018 = vadd.f32 0.0, %v1017
        %v1019 = vpop.f32.mrb[0].mxu0
        %1020 = vmatprep.mubr.f32.mxu0 0.0
        %1021 = vmatmul.mubr.f32.gmra.mrb[0].mxu0 %v856
        %v1022 = vpop.f32.mrb[0].mxu0
        %v1023 = vadd.f32 0.0, %v1022
        %v1024 = vpop.f32.mrb[0].mxu0
        %1025 = vmatprep.mubr.f32.mxu0 0.0
        %1026 = vmatmul.mubr.f32.gmra.mrb[0].mxu0 %v857
        %v1027 = vpop.f32.mrb[0].mxu0
        %v1028 = vadd.f32 0.0, %v1027
        %v1029 = vpop.f32.mrb[0].mxu0
        %1030 = vmatprep.mubr.f32.mxu0 0.0
        %1031 = vmatmul.mubr.f32.gmra.mrb[0].mxu0 %v858
        %v1032 = vpop.f32.mrb[0].mxu0
        %v1033 = vadd.f32 0.0, %v1032
        %v1034 = vpop.f32.mrb[0].mxu0
        %1035 = vmatprep.mubr.f32.mxu0 0.0
        %1036 = vmatmul.mubr.f32.gmra.mrb[0].mxu0 %v859
        %v1037 = vpop.f32.mrb[0].mxu0
        %v1038 = vadd.f32 0.0, %v1037
        %v1039 = vpop.f32.mrb[0].mxu0
        %1040 = vmatprep.mubr.f32.mxu0 0.0
        %1041 = vmatmul.mubr.f32.gmra.mrb[0].mxu0 %v860
        %v1042 = vpop.f32.mrb[0].mxu0
        %v1043 = vadd.f32 0.0, %v1042
        %v1044 = vpop.f32.mrb[0].mxu0
        %1045 = vmatprep.mubr.f32.mxu0 0.0
        %1046 = vmatmul.mubr.f32.gmra.mrb[0].mxu0 %v861
        %v1047 = vpop.f32.mrb[0].mxu0
        %v1048 = vadd.f32 0.0, %v1047
        %v1049 = vpop.f32.mrb[0].mxu0
        %1050 = vmatprep.mubr.f32.mxu0 0.0
        %1051 = vmatmul.mubr.f32.gmra.mrb[0].mxu0 %v862
        %v1052 = vpop.f32.mrb[0].mxu0
        %v1053 = vadd.f32 0.0, %v1052
        %v1054 = vpop.f32.mrb[0].mxu0
        %1055 = vmatprep.mubr.f32.mxu0 0.0
        %1056 = vmatmul.mubr.f32.gmra.mrb[0].mxu0 %v863
        %v1057 = vpop.f32.mrb[0].mxu0
        %v1058 = vadd.f32 0.0, %v1057
        %v1059 = vpop.f32.mrb[0].mxu0
        %1060 = vmatprep.mubr.f32.mxu0 0.0
        %1061 = vmatmul.mubr.f32.gmra.mrb[0].mxu0 %v864
        %v1062 = vpop.f32.mrb[0].mxu0
        %v1063 = vadd.f32 0.0, %v1062
        %v1064 = vpop.f32.mrb[0].mxu0
        %1065 = vmatprep.mubr.f32.mxu0 0.0
        %1066 = vmatmul.mubr.f32.gmra.mrb[0].mxu0 %v865
        %v1067 = vpop.f32.mrb[0].mxu0
        %v1068 = vadd.f32 0.0, %v1067
        %v1069 = vpop.f32.mrb[0].mxu0
        %1070 = vmatprep.mubr.f32.mxu0 0.0
        %1071 = vmatmul.mubr.f32.gmra.mrb[0].mxu0 %v866
        %v1072 = vpop.f32.mrb[0].mxu0
        %v1073 = vadd.f32 0.0, %v1072
        %v1074 = vpop.f32.mrb[0].mxu0
        %1075 = vmatprep.mubr.f32.mxu0 0.0
        %1076 = vmatmul.mubr.f32.gmra.mrb[0].mxu0 %v899
        %v1077 = vpop.f32.mrb[0].mxu0
        %v1078 = vadd.f32 0.0, %v1077
        %v1079 = vpop.f32.mrb[0].mxu0
        %1080 = vmatprep.mubr.f32.mxu0 0.0
        %1081 = vmatmul.mubr.f32.gmra.mrb[0].mxu0 %v900
        %v1082 = vpop.f32.mrb[0].mxu0
        %v1083 = vadd.f32 0.0, %v1082
        %v1084 = vpop.f32.mrb[0].mxu0
        %1085 = vmatprep.mubr.f32.mxu0 0.0
        %1086 = vmatmul.mubr.f32.gmra.mrb[0].mxu0 %v901
        %v1087 = vpop.f32.mrb[0].mxu0
        %v1088 = vadd.f32 0.0, %v1087
        %v1089 = vpop.f32.mrb[0].mxu0
        %1090 = vmatprep.mubr.f32.mxu0 0.0
        %1091 = vmatmul.mubr.f32.gmra.mrb[0].mxu0 %v902
        %v1092 = vpop.f32.mrb[0].mxu0
        %v1093 = vadd.f32 0.0, %v1092
        %v1094 = vpop.f32.mrb[0].mxu0
        %1095 = vmatprep.mubr.f32.mxu0 0.0
        %1096 = vmatmul.mubr.f32.gmra.mrb[0].mxu0 %v903
        %v1097 = vpop.f32.mrb[0].mxu0
        %v1098 = vadd.f32 0.0, %v1097
        %v1099 = vpop.f32.mrb[0].mxu0
        %1100 = vmatprep.mubr.f32.mxu0 0.0
        %1101 = vmatmul.mubr.f32.gmra.mrb[0].mxu0 %v904
        %v1102 = vpop.f32.mrb[0].mxu0
        %v1103 = vadd.f32 0.0, %v1102
        %v1104 = vpop.f32.mrb[0].mxu0
        %1105 = vmatprep.mubr.f32.mxu0 0.0
        %1106 = vmatmul.mubr.f32.gmra.mrb[0].mxu0 %v905
        %v1107 = vpop.f32.mrb[0].mxu0
        %v1108 = vadd.f32 0.0, %v1107
        %v1109 = vpop.f32.mrb[0].mxu0
        %1110 = vmatprep.mubr.f32.mxu0 0.0
        %1111 = vmatmul.mubr.f32.gmra.mrb[0].mxu0 %v906
        %v1112 = vpop.f32.mrb[0].mxu0
        %v1113 = vadd.f32 0.0, %v1112
        %v1114 = vpop.f32.mrb[0].mxu0
        %1115 = vmatprep.mubr.f32.mxu0 0.0
        %1116 = vmatmul.mubr.f32.gmra.mrb[0].mxu0 %v907
        %v1117 = vpop.f32.mrb[0].mxu0
        %v1118 = vadd.f32 0.0, %v1117
        %v1119 = vpop.f32.mrb[0].mxu0
        %1120 = vmatprep.mubr.f32.mxu0 0.0
        %1121 = vmatmul.mubr.f32.gmra.mrb[0].mxu0 %v908
        %v1122 = vpop.f32.mrb[0].mxu0
        %v1123 = vadd.f32 0.0, %v1122
        %v1124 = vpop.f32.mrb[0].mxu0
        %1125 = vmatprep.mubr.f32.mxu0 0.0
        %1126 = vmatmul.mubr.f32.gmra.mrb[0].mxu0 %v909
        %v1127 = vpop.f32.mrb[0].mxu0
        %v1128 = vadd.f32 0.0, %v1127
        %v1129 = vpop.f32.mrb[0].mxu0
        %1130 = vmatprep.mubr.f32.mxu0 0.0
        %1131 = vmatmul.mubr.f32.gmra.mrb[0].mxu0 %v910
        %v1132 = vpop.f32.mrb[0].mxu0
        %v1133 = vadd.f32 0.0, %v1132
        %v1134 = vpop.f32.mrb[0].mxu0
        %1135 = vmatprep.mubr.f32.mxu0 0.0
        %1136 = vmatmul.mubr.f32.gmra.mrb[0].mxu0 %v911
        %v1137 = vpop.f32.mrb[0].mxu0
        %v1138 = vadd.f32 0.0, %v1137
        %v1139 = vpop.f32.mrb[0].mxu0
        %1140 = vmatprep.mubr.f32.mxu0 0.0
        %1141 = vmatmul.mubr.f32.gmra.mrb[0].mxu0 %v912
        %v1142 = vpop.f32.mrb[0].mxu0
        %v1143 = vadd.f32 0.0, %v1142
        %v1144 = vpop.f32.mrb[0].mxu0
        %1145 = vmatprep.mubr.f32.mxu0 0.0
        %1146 = vmatmul.mubr.f32.gmra.mrb[0].mxu0 %v913
        %v1147 = vpop.f32.mrb[0].mxu0
        %v1148 = vadd.f32 0.0, %v1147
        %v1149 = vpop.f32.mrb[0].mxu0
        %1150 = vmatprep.mubr.f32.mxu0 0.0
        %1151 = vmatmul.mubr.f32.gmra.mrb[0].mxu0 %v914
        %v1152 = vpop.f32.mrb[0].mxu0
        %v1153 = vadd.f32 0.0, %v1152
        %v1154 = vpop.f32.mrb[0].mxu0
        %1155 = vdwg.mxu0
        %v1158 = vcombine.high %v265, %v265
        %v1160 = vunpack.c.l.s4 1966171168
        %v1161 = vunpack.c.0.s8 %v1160
        %v1162 = vlaneseq
        %v1163 = vshrl.u32 %v1162, 7
        %v1164 = vsub.s32 %v1161, %v1163
        %v1165 = vrot.slane %v265, %v1164
        %v1167 = vunpack.c.l.s4 1966171168
        %v1168 = vunpack.c.0.s8 %v1167
        %v1169 = vlaneseq
        %v1170 = vshrl.u32 %v1169, 7
        %v1171 = vsub.s32 %v1168, %v1170
        %v1172 = vrot.slane %v1158, %v1171
        %v1173 = vcombine.high %v1165, %v1165
        %v1174 = vcombine.high %v1172, %v1172
        %v1176 = vunpack.c.l.s4 1966171168
        %v1177 = vunpack.c.0.s8 %v1176
        %v1178 = vlaneseq
        %v1179 = vshrl.u32 %v1178, 7
        %v1180 = vsub.s32 %v1177, %v1179
        %v1181 = vrot.slane %v1165, %v1180
        %v1183 = vunpack.c.l.s4 1966171168
        %v1184 = vunpack.c.0.s8 %v1183
        %v1185 = vlaneseq
        %v1186 = vshrl.u32 %v1185, 7
        %v1187 = vsub.s32 %v1184, %v1186
        %v1188 = vrot.slane %v1172, %v1187
        %v1190 = vunpack.c.l.s4 1966171168
        %v1191 = vunpack.c.0.s8 %v1190
        %v1192 = vlaneseq
        %v1193 = vshrl.u32 %v1192, 7
        %v1194 = vsub.s32 %v1191, %v1193
        %v1195 = vrot.slane %v1173, %v1194
        %v1197 = vunpack.c.l.s4 1966171168
        %v1198 = vunpack.c.0.s8 %v1197
        %v1199 = vlaneseq
        %v1200 = vshrl.u32 %v1199, 7
        %v1201 = vsub.s32 %v1198, %v1200
        %v1202 = vrot.slane %v1174, %v1201
        %v1203 = vcombine.high %v1181, %v1181
        %v1204 = vcombine.high %v1188, %v1188
        %v1205 = vcombine.high %v1195, %v1195
        %v1206 = vcombine.high %v1202, %v1202
        %v1207 = vcombine.high %v268, %v268
        %v1209 = vunpack.c.l.s4 1966171168
        %v1210 = vunpack.c.0.s8 %v1209
        %v1211 = vlaneseq
        %v1212 = vshrl.u32 %v1211, 7
        %v1213 = vsub.s32 %v1210, %v1212
        %v1214 = vrot.slane %v268, %v1213
        %v1216 = vunpack.c.l.s4 1966171168
        %v1217 = vunpack.c.0.s8 %v1216
        %v1218 = vlaneseq
        %v1219 = vshrl.u32 %v1218, 7
        %v1220 = vsub.s32 %v1217, %v1219
        %v1221 = vrot.slane %v1207, %v1220
        %v1222 = vcombine.high %v1214, %v1214
        %v1223 = vcombine.high %v1221, %v1221
        %v1225 = vunpack.c.l.s4 1966171168
        %v1226 = vunpack.c.0.s8 %v1225
        %v1227 = vlaneseq
        %v1228 = vshrl.u32 %v1227, 7
        %v1229 = vsub.s32 %v1226, %v1228
        %v1230 = vrot.slane %v1214, %v1229
        %v1232 = vunpack.c.l.s4 1966171168
        %v1233 = vunpack.c.0.s8 %v1232
        %v1234 = vlaneseq
        %v1235 = vshrl.u32 %v1234, 7
        %v1236 = vsub.s32 %v1233, %v1235
        %v1237 = vrot.slane %v1221, %v1236
        %v1239 = vunpack.c.l.s4 1966171168
        %v1240 = vunpack.c.0.s8 %v1239
        %v1241 = vlaneseq
        %v1242 = vshrl.u32 %v1241, 7
        %v1243 = vsub.s32 %v1240, %v1242
        %v1244 = vrot.slane %v1222, %v1243
        %v1246 = vunpack.c.l.s4 1966171168
        %v1247 = vunpack.c.0.s8 %v1246
        %v1248 = vlaneseq
        %v1249 = vshrl.u32 %v1248, 7
        %v1250 = vsub.s32 %v1247, %v1249
        %v1251 = vrot.slane %v1223, %v1250
        %v1252 = vcombine.high %v1230, %v1230
        %v1253 = vcombine.high %v1237, %v1237
        %v1254 = vcombine.high %v1244, %v1244
        %v1255 = vcombine.high %v1251, %v1251
        %v1258 = vcombine.high %v266, %v266
        %v1260 = vunpack.c.l.s4 1966171168
        %v1261 = vunpack.c.0.s8 %v1260
        %v1262 = vlaneseq
        %v1263 = vshrl.u32 %v1262, 7
        %v1264 = vsub.s32 %v1261, %v1263
        %v1265 = vrot.slane %v266, %v1264
        %v1267 = vunpack.c.l.s4 1966171168
        %v1268 = vunpack.c.0.s8 %v1267
        %v1269 = vlaneseq
        %v1270 = vshrl.u32 %v1269, 7
        %v1271 = vsub.s32 %v1268, %v1270
        %v1272 = vrot.slane %v1258, %v1271
        %v1273 = vcombine.high %v1265, %v1265
        %v1274 = vcombine.high %v1272, %v1272
        %v1276 = vunpack.c.l.s4 1966171168
        %v1277 = vunpack.c.0.s8 %v1276
        %v1278 = vlaneseq
        %v1279 = vshrl.u32 %v1278, 7
        %v1280 = vsub.s32 %v1277, %v1279
        %v1281 = vrot.slane %v1265, %v1280
        %v1283 = vunpack.c.l.s4 1966171168
        %v1284 = vunpack.c.0.s8 %v1283
        %v1285 = vlaneseq
        %v1286 = vshrl.u32 %v1285, 7
        %v1287 = vsub.s32 %v1284, %v1286
        %v1288 = vrot.slane %v1272, %v1287
        %v1290 = vunpack.c.l.s4 1966171168
        %v1291 = vunpack.c.0.s8 %v1290
        %v1292 = vlaneseq
        %v1293 = vshrl.u32 %v1292, 7
        %v1294 = vsub.s32 %v1291, %v1293
        %v1295 = vrot.slane %v1273, %v1294
        %v1297 = vunpack.c.l.s4 1966171168
        %v1298 = vunpack.c.0.s8 %v1297
        %v1299 = vlaneseq
        %v1300 = vshrl.u32 %v1299, 7
        %v1301 = vsub.s32 %v1298, %v1300
        %v1302 = vrot.slane %v1274, %v1301
        %v1303 = vcombine.high %v1281, %v1281
        %v1304 = vcombine.high %v1288, %v1288
        %v1305 = vcombine.high %v1295, %v1295
        %v1306 = vcombine.high %v1302, %v1302
        %v1307 = vcombine.high %v269, %v269
        %v1309 = vunpack.c.l.s4 1966171168
        %v1310 = vunpack.c.0.s8 %v1309
        %v1311 = vlaneseq
        %v1312 = vshrl.u32 %v1311, 7
        %v1313 = vsub.s32 %v1310, %v1312
        %v1314 = vrot.slane %v269, %v1313
        %v1316 = vunpack.c.l.s4 1966171168
        %v1317 = vunpack.c.0.s8 %v1316
        %v1318 = vlaneseq
        %v1319 = vshrl.u32 %v1318, 7
        %v1320 = vsub.s32 %v1317, %v1319
        %v1321 = vrot.slane %v1307, %v1320
        %v1322 = vcombine.high %v1314, %v1314
        %v1323 = vcombine.high %v1321, %v1321
        %v1325 = vunpack.c.l.s4 1966171168
        %v1326 = vunpack.c.0.s8 %v1325
        %v1327 = vlaneseq
        %v1328 = vshrl.u32 %v1327, 7
        %v1329 = vsub.s32 %v1326, %v1328
        %v1330 = vrot.slane %v1314, %v1329
        %v1332 = vunpack.c.l.s4 1966171168
        %v1333 = vunpack.c.0.s8 %v1332
        %v1334 = vlaneseq
        %v1335 = vshrl.u32 %v1334, 7
        %v1336 = vsub.s32 %v1333, %v1335
        %v1337 = vrot.slane %v1321, %v1336
        %v1339 = vunpack.c.l.s4 1966171168
        %v1340 = vunpack.c.0.s8 %v1339
        %v1341 = vlaneseq
        %v1342 = vshrl.u32 %v1341, 7
        %v1343 = vsub.s32 %v1340, %v1342
        %v1344 = vrot.slane %v1322, %v1343
        %v1346 = vunpack.c.l.s4 1966171168
        %v1347 = vunpack.c.0.s8 %v1346
        %v1348 = vlaneseq
        %v1349 = vshrl.u32 %v1348, 7
        %v1350 = vsub.s32 %v1347, %v1349
        %v1351 = vrot.slane %v1323, %v1350
        %v1352 = vcombine.high %v1330, %v1330
        %v1353 = vcombine.high %v1337, %v1337
        %v1354 = vcombine.high %v1344, %v1344
        %v1355 = vcombine.high %v1351, %v1351
        %v1358 = vcombine.high %v453, %v453
        %v1360 = vunpack.c.l.s4 1966171168
        %v1361 = vunpack.c.0.s8 %v1360
        %v1362 = vlaneseq
        %v1363 = vshrl.u32 %v1362, 7
        %v1364 = vsub.s32 %v1361, %v1363
        %v1365 = vrot.slane %v453, %v1364
        %v1367 = vunpack.c.l.s4 1966171168
        %v1368 = vunpack.c.0.s8 %v1367
        %v1369 = vlaneseq
        %v1370 = vshrl.u32 %v1369, 7
        %v1371 = vsub.s32 %v1368, %v1370
        %v1372 = vrot.slane %v1358, %v1371
        %v1373 = vcombine.high %v1365, %v1365
        %v1374 = vcombine.high %v1372, %v1372
        %v1376 = vunpack.c.l.s4 1966171168
        %v1377 = vunpack.c.0.s8 %v1376
        %v1378 = vlaneseq
        %v1379 = vshrl.u32 %v1378, 7
        %v1380 = vsub.s32 %v1377, %v1379
        %v1381 = vrot.slane %v1365, %v1380
        %v1383 = vunpack.c.l.s4 1966171168
        %v1384 = vunpack.c.0.s8 %v1383
        %v1385 = vlaneseq
        %v1386 = vshrl.u32 %v1385, 7
        %v1387 = vsub.s32 %v1384, %v1386
        %v1388 = vrot.slane %v1372, %v1387
        %v1390 = vunpack.c.l.s4 1966171168
        %v1391 = vunpack.c.0.s8 %v1390
        %v1392 = vlaneseq
        %v1393 = vshrl.u32 %v1392, 7
        %v1394 = vsub.s32 %v1391, %v1393
        %v1395 = vrot.slane %v1373, %v1394
        %v1397 = vunpack.c.l.s4 1966171168
        %v1398 = vunpack.c.0.s8 %v1397
        %v1399 = vlaneseq
        %v1400 = vshrl.u32 %v1399, 7
        %v1401 = vsub.s32 %v1398, %v1400
        %v1402 = vrot.slane %v1374, %v1401
        %v1403 = vcombine.high %v1381, %v1381
        %v1404 = vcombine.high %v1388, %v1388
        %v1405 = vcombine.high %v1395, %v1395
        %v1406 = vcombine.high %v1402, %v1402
        %v1407 = vcombine.high %v454, %v454
        %v1409 = vunpack.c.l.s4 1966171168
        %v1410 = vunpack.c.0.s8 %v1409
        %v1411 = vlaneseq
        %v1412 = vshrl.u32 %v1411, 7
        %v1413 = vsub.s32 %v1410, %v1412
        %v1414 = vrot.slane %v454, %v1413
        %v1416 = vunpack.c.l.s4 1966171168
        %v1417 = vunpack.c.0.s8 %v1416
        %v1418 = vlaneseq
        %v1419 = vshrl.u32 %v1418, 7
        %v1420 = vsub.s32 %v1417, %v1419
        %v1421 = vrot.slane %v1407, %v1420
        %v1422 = vcombine.high %v1414, %v1414
        %v1423 = vcombine.high %v1421, %v1421
        %v1425 = vunpack.c.l.s4 1966171168
        %v1426 = vunpack.c.0.s8 %v1425
        %v1427 = vlaneseq
        %v1428 = vshrl.u32 %v1427, 7
        %v1429 = vsub.s32 %v1426, %v1428
        %v1430 = vrot.slane %v1414, %v1429
        %v1432 = vunpack.c.l.s4 1966171168
        %v1433 = vunpack.c.0.s8 %v1432
        %v1434 = vlaneseq
        %v1435 = vshrl.u32 %v1434, 7
        %v1436 = vsub.s32 %v1433, %v1435
        %v1437 = vrot.slane %v1421, %v1436
        %v1439 = vunpack.c.l.s4 1966171168
        %v1440 = vunpack.c.0.s8 %v1439
        %v1441 = vlaneseq
        %v1442 = vshrl.u32 %v1441, 7
        %v1443 = vsub.s32 %v1440, %v1442
        %v1444 = vrot.slane %v1422, %v1443
        %v1446 = vunpack.c.l.s4 1966171168
        %v1447 = vunpack.c.0.s8 %v1446
        %v1448 = vlaneseq
        %v1449 = vshrl.u32 %v1448, 7
        %v1450 = vsub.s32 %v1447, %v1449
        %v1451 = vrot.slane %v1423, %v1450
        %v1452 = vcombine.high %v1430, %v1430
        %v1453 = vcombine.high %v1437, %v1437
        %v1454 = vcombine.high %v1444, %v1444
        %v1455 = vcombine.high %v1451, %v1451
        %v1456 = vlaneseq
        %v1457 = vshrl.u32 %v1456, 7
        %v1458 = vsub.s32 0, %v1457
        %v1459 = vrot.slane %v1181, %v1458
        %v1460 = vlaneseq
        %v1461 = vshrl.u32 %v1460, 7
        %v1462 = vsub.s32 0, %v1461
        %v1463 = vrot.slane %v1195, %v1462
        %v1464 = vlaneseq
        %v1465 = vshrl.u32 %v1464, 7
        %v1466 = vsub.s32 0, %v1465
        %v1467 = vrot.slane %v1203, %v1466
        %v1468 = vlaneseq
        %v1469 = vshrl.u32 %v1468, 7
        %v1470 = vsub.s32 0, %v1469
        %v1471 = vrot.slane %v1205, %v1470
        %v1472 = vlaneseq
        %v1473 = vshrl.u32 %v1472, 7
        %v1474 = vsub.s32 0, %v1473
        %v1475 = vrot.slane %v1188, %v1474
        %v1476 = vlaneseq
        %v1477 = vshrl.u32 %v1476, 7
        %v1478 = vsub.s32 0, %v1477
        %v1479 = vrot.slane %v1202, %v1478
        %v1480 = vlaneseq
        %v1481 = vshrl.u32 %v1480, 7
        %v1482 = vsub.s32 0, %v1481
        %v1483 = vrot.slane %v1204, %v1482
        %v1484 = vlaneseq
        %v1485 = vshrl.u32 %v1484, 7
        %v1486 = vsub.s32 0, %v1485
        %v1487 = vrot.slane %v1206, %v1486
        %v1488 = vlaneseq
        %v1489 = vshrl.u32 %v1488, 7
        %v1490 = vsub.s32 0, %v1489
        %v1491 = vrot.slane %v1230, %v1490
        %v1492 = vlaneseq
        %v1493 = vshrl.u32 %v1492, 7
        %v1494 = vsub.s32 0, %v1493
        %v1495 = vrot.slane %v1244, %v1494
        %v1496 = vlaneseq
        %v1497 = vshrl.u32 %v1496, 7
        %v1498 = vsub.s32 0, %v1497
        %v1499 = vrot.slane %v1252, %v1498
        %v1500 = vlaneseq
        %v1501 = vshrl.u32 %v1500, 7
        %v1502 = vsub.s32 0, %v1501
        %v1503 = vrot.slane %v1254, %v1502
        %v1504 = vlaneseq
        %v1505 = vshrl.u32 %v1504, 7
        %v1506 = vsub.s32 0, %v1505
        %v1507 = vrot.slane %v1237, %v1506
        %v1508 = vlaneseq
        %v1509 = vshrl.u32 %v1508, 7
        %v1510 = vsub.s32 0, %v1509
        %v1511 = vrot.slane %v1251, %v1510
        %v1512 = vlaneseq
        %v1513 = vshrl.u32 %v1512, 7
        %v1514 = vsub.s32 0, %v1513
        %v1515 = vrot.slane %v1253, %v1514
        %v1516 = vlaneseq
        %v1517 = vshrl.u32 %v1516, 7
        %v1518 = vsub.s32 0, %v1517
        %v1519 = vrot.slane %v1255, %v1518
        %v1536 = vmul.f32 %v998, %v1459
        %v1537 = vmul.f32 %v1003, %v1463
        %v1538 = vmul.f32 %v1008, %v1467
        %v1539 = vmul.f32 %v1013, %v1471
        %v1540 = vmul.f32 %v1018, %v1475
        %v1541 = vmul.f32 %v1023, %v1479
        %v1542 = vmul.f32 %v1028, %v1483
        %v1543 = vmul.f32 %v1033, %v1487
        %v1544 = vmul.f32 %v1038, %v1491
        %v1545 = vmul.f32 %v1043, %v1495
        %v1546 = vmul.f32 %v1048, %v1499
        %v1547 = vmul.f32 %v1053, %v1503
        %v1548 = vmul.f32 %v1058, %v1507
        %v1549 = vmul.f32 %v1063, %v1511
        %v1550 = vmul.f32 %v1068, %v1515
        %v1551 = vmul.f32 %v1073, %v1519
        %1552 = vadd.xlane.f32.xlu0 %v1536
        %v1553 = vpop.xlane.xlu0 %1552
        %1554 = vadd.xlane.f32.xlu0 %v1537
        %v1555 = vpop.xlane.xlu0 %1554
        %1556 = vadd.xlane.f32.xlu0 %v1538
        %v1557 = vpop.xlane.xlu0 %1556
        %1558 = vadd.xlane.f32.xlu0 %v1539
        %v1559 = vpop.xlane.xlu0 %1558
        %1560 = vadd.xlane.f32.xlu0 %v1540
        %v1561 = vpop.xlane.xlu0 %1560
        %1562 = vadd.xlane.f32.xlu0 %v1541
        %v1563 = vpop.xlane.xlu0 %1562
        %1564 = vadd.xlane.f32.xlu0 %v1542
        %v1565 = vpop.xlane.xlu0 %1564
        %1566 = vadd.xlane.f32.xlu0 %v1543
        %v1567 = vpop.xlane.xlu0 %1566
        %1568 = vadd.xlane.f32.xlu0 %v1544
        %v1569 = vpop.xlane.xlu0 %1568
        %1570 = vadd.xlane.f32.xlu0 %v1545
        %v1571 = vpop.xlane.xlu0 %1570
        %1572 = vadd.xlane.f32.xlu0 %v1546
        %v1573 = vpop.xlane.xlu0 %1572
        %1574 = vadd.xlane.f32.xlu0 %v1547
        %v1575 = vpop.xlane.xlu0 %1574
        %1576 = vadd.xlane.f32.xlu0 %v1548
        %v1577 = vpop.xlane.xlu0 %1576
        %1578 = vadd.xlane.f32.xlu0 %v1549
        %v1579 = vpop.xlane.xlu0 %1578
        %1580 = vadd.xlane.f32.xlu0 %v1550
        %v1581 = vpop.xlane.xlu0 %1580
        %1582 = vadd.xlane.f32.xlu0 %v1551
        %v1583 = vpop.xlane.xlu0 %1582
        %v1584 = vand.u32 2147483647, %v998
        %v1585 = vand.u32 2147483647, %v1003
        %v1586 = vand.u32 2147483647, %v1008
        %v1587 = vand.u32 2147483647, %v1013
        %v1588 = vand.u32 2147483647, %v1018
        %v1589 = vand.u32 2147483647, %v1023
        %v1590 = vand.u32 2147483647, %v1028
        %v1591 = vand.u32 2147483647, %v1033
        %v1592 = vand.u32 2147483647, %v1038
        %v1593 = vand.u32 2147483647, %v1043
        %v1594 = vand.u32 2147483647, %v1048
        %v1595 = vand.u32 2147483647, %v1053
        %v1596 = vand.u32 2147483647, %v1058
        %v1597 = vand.u32 2147483647, %v1063
        %v1598 = vand.u32 2147483647, %v1068
        %v1599 = vand.u32 2147483647, %v1073
        %v1600 = vlaneseq
        %v1601 = vshrl.u32 %v1600, 7
        %v1602 = vsub.s32 0, %v1601
        %v1603 = vrot.slane %v1281, %v1602
        %v1604 = vlaneseq
        %v1605 = vshrl.u32 %v1604, 7
        %v1606 = vsub.s32 0, %v1605
        %v1607 = vrot.slane %v1295, %v1606
        %v1608 = vlaneseq
        %v1609 = vshrl.u32 %v1608, 7
        %v1610 = vsub.s32 0, %v1609
        %v1611 = vrot.slane %v1303, %v1610
        %v1612 = vlaneseq
        %v1613 = vshrl.u32 %v1612, 7
        %v1614 = vsub.s32 0, %v1613
        %v1615 = vrot.slane %v1305, %v1614
        %v1616 = vlaneseq
        %v1617 = vshrl.u32 %v1616, 7
        %v1618 = vsub.s32 0, %v1617
        %v1619 = vrot.slane %v1288, %v1618
        %v1620 = vlaneseq
        %v1621 = vshrl.u32 %v1620, 7
        %v1622 = vsub.s32 0, %v1621
        %v1623 = vrot.slane %v1302, %v1622
        %v1624 = vlaneseq
        %v1625 = vshrl.u32 %v1624, 7
        %v1626 = vsub.s32 0, %v1625
        %v1627 = vrot.slane %v1304, %v1626
        %v1628 = vlaneseq
        %v1629 = vshrl.u32 %v1628, 7
        %v1630 = vsub.s32 0, %v1629
        %v1631 = vrot.slane %v1306, %v1630
        %v1632 = vlaneseq
        %v1633 = vshrl.u32 %v1632, 7
        %v1634 = vsub.s32 0, %v1633
        %v1635 = vrot.slane %v1330, %v1634
        %v1636 = vlaneseq
        %v1637 = vshrl.u32 %v1636, 7
        %v1638 = vsub.s32 0, %v1637
        %v1639 = vrot.slane %v1344, %v1638
        %v1640 = vlaneseq
        %v1641 = vshrl.u32 %v1640, 7
        %v1642 = vsub.s32 0, %v1641
        %v1643 = vrot.slane %v1352, %v1642
        %v1644 = vlaneseq
        %v1645 = vshrl.u32 %v1644, 7
        %v1646 = vsub.s32 0, %v1645
        %v1647 = vrot.slane %v1354, %v1646
        %v1648 = vlaneseq
        %v1649 = vshrl.u32 %v1648, 7
        %v1650 = vsub.s32 0, %v1649
        %v1651 = vrot.slane %v1337, %v1650
        %v1652 = vlaneseq
        %v1653 = vshrl.u32 %v1652, 7
        %v1654 = vsub.s32 0, %v1653
        %v1655 = vrot.slane %v1351, %v1654
        %v1656 = vlaneseq
        %v1657 = vshrl.u32 %v1656, 7
        %v1658 = vsub.s32 0, %v1657
        %v1659 = vrot.slane %v1353, %v1658
        %v1660 = vlaneseq
        %v1661 = vshrl.u32 %v1660, 7
        %v1662 = vsub.s32 0, %v1661
        %v1663 = vrot.slane %v1355, %v1662
        %v1680 = vmul.f32 %v1584, %v1603
        %v1681 = vmul.f32 %v1585, %v1607
        %v1682 = vmul.f32 %v1586, %v1611
        %v1683 = vmul.f32 %v1587, %v1615
        %v1684 = vmul.f32 %v1588, %v1619
        %v1685 = vmul.f32 %v1589, %v1623
        %v1686 = vmul.f32 %v1590, %v1627
        %v1687 = vmul.f32 %v1591, %v1631
        %v1688 = vmul.f32 %v1592, %v1635
        %v1689 = vmul.f32 %v1593, %v1639
        %v1690 = vmul.f32 %v1594, %v1643
        %v1691 = vmul.f32 %v1595, %v1647
        %v1692 = vmul.f32 %v1596, %v1651
        %v1693 = vmul.f32 %v1597, %v1655
        %v1694 = vmul.f32 %v1598, %v1659
        %v1695 = vmul.f32 %v1599, %v1663
        %1696 = vadd.xlane.f32.xlu0 %v1680
        %v1697 = vpop.xlane.xlu0 %1696
        %1698 = vadd.xlane.f32.xlu0 %v1681
        %v1699 = vpop.xlane.xlu0 %1698
        %1700 = vadd.xlane.f32.xlu0 %v1682
        %v1701 = vpop.xlane.xlu0 %1700
        %1702 = vadd.xlane.f32.xlu0 %v1683
        %v1703 = vpop.xlane.xlu0 %1702
        %1704 = vadd.xlane.f32.xlu0 %v1684
        %v1705 = vpop.xlane.xlu0 %1704
        %1706 = vadd.xlane.f32.xlu0 %v1685
        %v1707 = vpop.xlane.xlu0 %1706
        %1708 = vadd.xlane.f32.xlu0 %v1686
        %v1709 = vpop.xlane.xlu0 %1708
        %1710 = vadd.xlane.f32.xlu0 %v1687
        %v1711 = vpop.xlane.xlu0 %1710
        %1712 = vadd.xlane.f32.xlu0 %v1688
        %v1713 = vpop.xlane.xlu0 %1712
        %1714 = vadd.xlane.f32.xlu0 %v1689
        %v1715 = vpop.xlane.xlu0 %1714
        %1716 = vadd.xlane.f32.xlu0 %v1690
        %v1717 = vpop.xlane.xlu0 %1716
        %1718 = vadd.xlane.f32.xlu0 %v1691
        %v1719 = vpop.xlane.xlu0 %1718
        %1720 = vadd.xlane.f32.xlu0 %v1692
        %v1721 = vpop.xlane.xlu0 %1720
        %1722 = vadd.xlane.f32.xlu0 %v1693
        %v1723 = vpop.xlane.xlu0 %1722
        %1724 = vadd.xlane.f32.xlu0 %v1694
        %v1725 = vpop.xlane.xlu0 %1724
        %1726 = vadd.xlane.f32.xlu0 %v1695
        %v1727 = vpop.xlane.xlu0 %1726
        %v1728 = vsub.f32 %v1553, %v1697
        %v1729 = vsub.f32 %v1555, %v1699
        %v1730 = vsub.f32 %v1557, %v1701
        %v1731 = vsub.f32 %v1559, %v1703
        %v1732 = vsub.f32 %v1561, %v1705
        %v1733 = vsub.f32 %v1563, %v1707
        %v1734 = vsub.f32 %v1565, %v1709
        %v1735 = vsub.f32 %v1567, %v1711
        %v1736 = vsub.f32 %v1569, %v1713
        %v1737 = vsub.f32 %v1571, %v1715
        %v1738 = vsub.f32 %v1573, %v1717
        %v1739 = vsub.f32 %v1575, %v1719
        %v1740 = vsub.f32 %v1577, %v1721
        %v1741 = vsub.f32 %v1579, %v1723
        %v1742 = vsub.f32 %v1581, %v1725
        %v1743 = vsub.f32 %v1583, %v1727
        %v1744 = vmul.f32 %v851, %v422
        %v1745 = vmul.f32 %v852, %v422
        %v1746 = vmul.f32 %v853, %v422
        %v1747 = vmul.f32 %v854, %v422
        %v1748 = vmul.f32 %v855, %v422
        %v1749 = vmul.f32 %v856, %v422
        %v1750 = vmul.f32 %v857, %v422
        %v1751 = vmul.f32 %v858, %v422
        %v1752 = vmul.f32 %v859, %v422
        %v1753 = vmul.f32 %v860, %v422
        %v1754 = vmul.f32 %v861, %v422
        %v1755 = vmul.f32 %v862, %v422
        %v1756 = vmul.f32 %v863, %v422
        %v1757 = vmul.f32 %v864, %v422
        %v1758 = vmul.f32 %v865, %v422
        %v1759 = vmul.f32 %v866, %v422
        %1760 = vadd.xlane.f32.xlu0 %v1744
        %v1761 = vpop.xlane.xlu0 %1760
        %1762 = vadd.xlane.f32.xlu0 %v1745
        %v1763 = vpop.xlane.xlu0 %1762
        %1764 = vadd.xlane.f32.xlu0 %v1746
        %v1765 = vpop.xlane.xlu0 %1764
        %1766 = vadd.xlane.f32.xlu0 %v1747
        %v1767 = vpop.xlane.xlu0 %1766
        %1768 = vadd.xlane.f32.xlu0 %v1748
        %v1769 = vpop.xlane.xlu0 %1768
        %1770 = vadd.xlane.f32.xlu0 %v1749
        %v1771 = vpop.xlane.xlu0 %1770
        %1772 = vadd.xlane.f32.xlu0 %v1750
        %v1773 = vpop.xlane.xlu0 %1772
        %1774 = vadd.xlane.f32.xlu0 %v1751
        %v1775 = vpop.xlane.xlu0 %1774
        %1776 = vadd.xlane.f32.xlu0 %v1752
        %v1777 = vpop.xlane.xlu0 %1776
        %1778 = vadd.xlane.f32.xlu0 %v1753
        %v1779 = vpop.xlane.xlu0 %1778
        %1780 = vadd.xlane.f32.xlu0 %v1754
        %v1781 = vpop.xlane.xlu0 %1780
        %1782 = vadd.xlane.f32.xlu0 %v1755
        %v1783 = vpop.xlane.xlu0 %1782
        %1784 = vadd.xlane.f32.xlu0 %v1756
        %v1785 = vpop.xlane.xlu0 %1784
        %1786 = vadd.xlane.f32.xlu0 %v1757
        %v1787 = vpop.xlane.xlu0 %1786
        %1788 = vadd.xlane.f32.xlu0 %v1758
        %v1789 = vpop.xlane.xlu0 %1788
        %1790 = vadd.xlane.f32.xlu0 %v1759
        %v1791 = vpop.xlane.xlu0 %1790
        %v1792 = vadd.f32 %v1728, %v1761
        %v1793 = vadd.f32 %v1729, %v1763
        %v1794 = vadd.f32 %v1730, %v1765
        %v1795 = vadd.f32 %v1731, %v1767
        %v1796 = vadd.f32 %v1732, %v1769
        %v1797 = vadd.f32 %v1733, %v1771
        %v1798 = vadd.f32 %v1734, %v1773
        %v1799 = vadd.f32 %v1735, %v1775
        %v1800 = vadd.f32 %v1736, %v1777
        %v1801 = vadd.f32 %v1737, %v1779
        %v1802 = vadd.f32 %v1738, %v1781
        %v1803 = vadd.f32 %v1739, %v1783
        %v1804 = vadd.f32 %v1740, %v1785
        %v1805 = vadd.f32 %v1741, %v1787
        %v1806 = vadd.f32 %v1742, %v1789
        %v1807 = vadd.f32 %v1743, %v1791
        %v1808 = vlaneseq
        %v1809 = vshrl.u32 %v1808, 7
        %v1810 = vsub.s32 0, %v1809
        %v1811 = vrot.slane %v1381, %v1810
        %v1812 = vlaneseq
        %v1813 = vshrl.u32 %v1812, 7
        %v1814 = vsub.s32 0, %v1813
        %v1815 = vrot.slane %v1395, %v1814
        %v1816 = vlaneseq
        %v1817 = vshrl.u32 %v1816, 7
        %v1818 = vsub.s32 0, %v1817
        %v1819 = vrot.slane %v1403, %v1818
        %v1820 = vlaneseq
        %v1821 = vshrl.u32 %v1820, 7
        %v1822 = vsub.s32 0, %v1821
        %v1823 = vrot.slane %v1405, %v1822
        %v1824 = vlaneseq
        %v1825 = vshrl.u32 %v1824, 7
        %v1826 = vsub.s32 0, %v1825
        %v1827 = vrot.slane %v1388, %v1826
        %v1828 = vlaneseq
        %v1829 = vshrl.u32 %v1828, 7
        %v1830 = vsub.s32 0, %v1829
        %v1831 = vrot.slane %v1402, %v1830
        %v1832 = vlaneseq
        %v1833 = vshrl.u32 %v1832, 7
        %v1834 = vsub.s32 0, %v1833
        %v1835 = vrot.slane %v1404, %v1834
        %v1836 = vlaneseq
        %v1837 = vshrl.u32 %v1836, 7
        %v1838 = vsub.s32 0, %v1837
        %v1839 = vrot.slane %v1406, %v1838
        %v1840 = vlaneseq
        %v1841 = vshrl.u32 %v1840, 7
        %v1842 = vsub.s32 0, %v1841
        %v1843 = vrot.slane %v1430, %v1842
        %v1844 = vlaneseq
        %v1845 = vshrl.u32 %v1844, 7
        %v1846 = vsub.s32 0, %v1845
        %v1847 = vrot.slane %v1444, %v1846
        %v1848 = vlaneseq
        %v1849 = vshrl.u32 %v1848, 7
        %v1850 = vsub.s32 0, %v1849
        %v1851 = vrot.slane %v1452, %v1850
        %v1852 = vlaneseq
        %v1853 = vshrl.u32 %v1852, 7
        %v1854 = vsub.s32 0, %v1853
        %v1855 = vrot.slane %v1454, %v1854
        %v1856 = vlaneseq
        %v1857 = vshrl.u32 %v1856, 7
        %v1858 = vsub.s32 0, %v1857
        %v1859 = vrot.slane %v1437, %v1858
        %v1860 = vlaneseq
        %v1861 = vshrl.u32 %v1860, 7
        %v1862 = vsub.s32 0, %v1861
        %v1863 = vrot.slane %v1451, %v1862
        %v1864 = vlaneseq
        %v1865 = vshrl.u32 %v1864, 7
        %v1866 = vsub.s32 0, %v1865
        %v1867 = vrot.slane %v1453, %v1866
        %v1868 = vlaneseq
        %v1869 = vshrl.u32 %v1868, 7
        %v1870 = vsub.s32 0, %v1869
        %v1871 = vrot.slane %v1455, %v1870
        %v1888 = vmul.f32 %v276, %v1811
        %v1889 = vmul.f32 %v276, %v1815
        %v1890 = vmul.f32 %v276, %v1819
        %v1891 = vmul.f32 %v276, %v1823
        %v1892 = vmul.f32 %v276, %v1827
        %v1893 = vmul.f32 %v276, %v1831
        %v1894 = vmul.f32 %v276, %v1835
        %v1895 = vmul.f32 %v276, %v1839
        %v1896 = vmul.f32 %v276, %v1843
        %v1897 = vmul.f32 %v276, %v1847
        %v1898 = vmul.f32 %v276, %v1851
        %v1899 = vmul.f32 %v276, %v1855
        %v1900 = vmul.f32 %v276, %v1859
        %v1901 = vmul.f32 %v276, %v1863
        %v1902 = vmul.f32 %v276, %v1867
        %v1903 = vmul.f32 %v276, %v1871
        %1904 = vadd.xlane.f32.xlu0 %v1888
        %v1905 = vpop.xlane.xlu0 %1904
        %1906 = vadd.xlane.f32.xlu0 %v1889
        %v1907 = vpop.xlane.xlu0 %1906
        %1908 = vadd.xlane.f32.xlu0 %v1890
        %v1909 = vpop.xlane.xlu0 %1908
        %1910 = vadd.xlane.f32.xlu0 %v1891
        %v1911 = vpop.xlane.xlu0 %1910
        %1912 = vadd.xlane.f32.xlu0 %v1892
        %v1913 = vpop.xlane.xlu0 %1912
        %1914 = vadd.xlane.f32.xlu0 %v1893
        %v1915 = vpop.xlane.xlu0 %1914
        %1916 = vadd.xlane.f32.xlu0 %v1894
        %v1917 = vpop.xlane.xlu0 %1916
        %1918 = vadd.xlane.f32.xlu0 %v1895
        %v1919 = vpop.xlane.xlu0 %1918
        %1920 = vadd.xlane.f32.xlu0 %v1896
        %v1921 = vpop.xlane.xlu0 %1920
        %1922 = vadd.xlane.f32.xlu0 %v1897
        %v1923 = vpop.xlane.xlu0 %1922
        %1924 = vadd.xlane.f32.xlu0 %v1898
        %v1925 = vpop.xlane.xlu0 %1924
        %1926 = vadd.xlane.f32.xlu0 %v1899
        %v1927 = vpop.xlane.xlu0 %1926
        %1928 = vadd.xlane.f32.xlu0 %v1900
        %v1929 = vpop.xlane.xlu0 %1928
        %1930 = vadd.xlane.f32.xlu0 %v1901
        %v1931 = vpop.xlane.xlu0 %1930
        %1932 = vadd.xlane.f32.xlu0 %v1902
        %v1933 = vpop.xlane.xlu0 %1932
        %1934 = vadd.xlane.f32.xlu0 %v1903
        %v1935 = vpop.xlane.xlu0 %1934
        %v1936 = vadd.f32 %v1792, %v1905
        %v1937 = vadd.f32 %v1793, %v1907
        %v1938 = vadd.f32 %v1794, %v1909
        %v1939 = vadd.f32 %v1795, %v1911
        %v1940 = vadd.f32 %v1796, %v1913
        %v1941 = vadd.f32 %v1797, %v1915
        %v1942 = vadd.f32 %v1798, %v1917
        %v1943 = vadd.f32 %v1799, %v1919
        %v1944 = vadd.f32 %v1800, %v1921
        %v1945 = vadd.f32 %v1801, %v1923
        %v1946 = vadd.f32 %v1802, %v1925
        %v1947 = vadd.f32 %v1803, %v1927
        %v1948 = vadd.f32 %v1804, %v1929
        %v1949 = vadd.f32 %v1805, %v1931
        %v1950 = vadd.f32 %v1806, %v1933
        %v1951 = vadd.f32 %v1807, %v1935
        %v1952 = vlaneseq
        %v1953 = vshrl.u32 %v1952, 7
        %v1954 = vsub.s32 1, %v1953
        %v1955 = vrot.slane %v277, %v1954
        %1958 = vbcast.lane.b32.xlu0 %v1955, 256
        %v1959 = vpop.permute.xlu0 %1958
        %v1961 = vadd.f32 %v1936, %v1959
        %v1962 = vadd.f32 %v1937, %v1959
        %v1963 = vadd.f32 %v1938, %v1959
        %v1964 = vadd.f32 %v1939, %v1959
        %v1965 = vadd.f32 %v1940, %v1959
        %v1966 = vadd.f32 %v1941, %v1959
        %v1967 = vadd.f32 %v1942, %v1959
        %v1968 = vadd.f32 %v1943, %v1959
        %v1969 = vadd.f32 %v1944, %v1959
        %v1970 = vadd.f32 %v1945, %v1959
        %v1971 = vadd.f32 %v1946, %v1959
        %v1972 = vadd.f32 %v1947, %v1959
        %v1973 = vadd.f32 %v1948, %v1959
        %v1974 = vadd.f32 %v1949, %v1959
        %v1975 = vadd.f32 %v1950, %v1959
        %v1976 = vadd.f32 %v1951, %v1959
        %v1977 = vmul.f32 %v1078, %v1459
        %v1978 = vmul.f32 %v1083, %v1463
        %v1979 = vmul.f32 %v1088, %v1467
        %v1980 = vmul.f32 %v1093, %v1471
        %v1981 = vmul.f32 %v1098, %v1475
        %v1982 = vmul.f32 %v1103, %v1479
        %v1983 = vmul.f32 %v1108, %v1483
        %v1984 = vmul.f32 %v1113, %v1487
        %v1985 = vmul.f32 %v1118, %v1491
        %v1986 = vmul.f32 %v1123, %v1495
        %v1987 = vmul.f32 %v1128, %v1499
        %v1988 = vmul.f32 %v1133, %v1503
        %v1989 = vmul.f32 %v1138, %v1507
        %v1990 = vmul.f32 %v1143, %v1511
        %v1991 = vmul.f32 %v1148, %v1515
        %v1992 = vmul.f32 %v1153, %v1519
        %1993 = vadd.xlane.f32.xlu0 %v1977
        %v1994 = vpop.xlane.xlu0 %1993
        %1995 = vadd.xlane.f32.xlu0 %v1978
        %v1996 = vpop.xlane.xlu0 %1995
        %1997 = vadd.xlane.f32.xlu0 %v1979
        %v1998 = vpop.xlane.xlu0 %1997
        %1999 = vadd.xlane.f32.xlu0 %v1980
        %v2000 = vpop.xlane.xlu0 %1999
        %2001 = vadd.xlane.f32.xlu0 %v1981
        %v2002 = vpop.xlane.xlu0 %2001
        %2003 = vadd.xlane.f32.xlu0 %v1982
        %v2004 = vpop.xlane.xlu0 %2003
        %2005 = vadd.xlane.f32.xlu0 %v1983
        %v2006 = vpop.xlane.xlu0 %2005
        %2007 = vadd.xlane.f32.xlu0 %v1984
        %v2008 = vpop.xlane.xlu0 %2007
        %2009 = vadd.xlane.f32.xlu0 %v1985
        %v2010 = vpop.xlane.xlu0 %2009
        %2011 = vadd.xlane.f32.xlu0 %v1986
        %v2012 = vpop.xlane.xlu0 %2011
        %2013 = vadd.xlane.f32.xlu0 %v1987
        %v2014 = vpop.xlane.xlu0 %2013
        %2015 = vadd.xlane.f32.xlu0 %v1988
        %v2016 = vpop.xlane.xlu0 %2015
        %2017 = vadd.xlane.f32.xlu0 %v1989
        %v2018 = vpop.xlane.xlu0 %2017
        %2019 = vadd.xlane.f32.xlu0 %v1990
        %v2020 = vpop.xlane.xlu0 %2019
        %2021 = vadd.xlane.f32.xlu0 %v1991
        %v2022 = vpop.xlane.xlu0 %2021
        %2023 = vadd.xlane.f32.xlu0 %v1992
        %v2024 = vpop.xlane.xlu0 %2023
        %v2025 = vand.u32 2147483647, %v1078
        %v2026 = vand.u32 2147483647, %v1083
        %v2027 = vand.u32 2147483647, %v1088
        %v2028 = vand.u32 2147483647, %v1093
        %v2029 = vand.u32 2147483647, %v1098
        %v2030 = vand.u32 2147483647, %v1103
        %v2031 = vand.u32 2147483647, %v1108
        %v2032 = vand.u32 2147483647, %v1113
        %v2033 = vand.u32 2147483647, %v1118
        %v2034 = vand.u32 2147483647, %v1123
        %v2035 = vand.u32 2147483647, %v1128
        %v2036 = vand.u32 2147483647, %v1133
        %v2037 = vand.u32 2147483647, %v1138
        %v2038 = vand.u32 2147483647, %v1143
        %v2039 = vand.u32 2147483647, %v1148
        %v2040 = vand.u32 2147483647, %v1153
        %v2041 = vmul.f32 %v2025, %v1603
        %v2042 = vmul.f32 %v2026, %v1607
        %v2043 = vmul.f32 %v2027, %v1611
        %v2044 = vmul.f32 %v2028, %v1615
        %v2045 = vmul.f32 %v2029, %v1619
        %v2046 = vmul.f32 %v2030, %v1623
        %v2047 = vmul.f32 %v2031, %v1627
        %v2048 = vmul.f32 %v2032, %v1631
        %v2049 = vmul.f32 %v2033, %v1635
        %v2050 = vmul.f32 %v2034, %v1639
        %v2051 = vmul.f32 %v2035, %v1643
        %v2052 = vmul.f32 %v2036, %v1647
        %v2053 = vmul.f32 %v2037, %v1651
        %v2054 = vmul.f32 %v2038, %v1655
        %v2055 = vmul.f32 %v2039, %v1659
        %v2056 = vmul.f32 %v2040, %v1663
        %2057 = vadd.xlane.f32.xlu0 %v2041
        %v2058 = vpop.xlane.xlu0 %2057
        %2059 = vadd.xlane.f32.xlu0 %v2042
        %v2060 = vpop.xlane.xlu0 %2059
        %2061 = vadd.xlane.f32.xlu0 %v2043
        %v2062 = vpop.xlane.xlu0 %2061
        %2063 = vadd.xlane.f32.xlu0 %v2044
        %v2064 = vpop.xlane.xlu0 %2063
        %2065 = vadd.xlane.f32.xlu0 %v2045
        %v2066 = vpop.xlane.xlu0 %2065
        %2067 = vadd.xlane.f32.xlu0 %v2046
        %v2068 = vpop.xlane.xlu0 %2067
        %2069 = vadd.xlane.f32.xlu0 %v2047
        %v2070 = vpop.xlane.xlu0 %2069
        %2071 = vadd.xlane.f32.xlu0 %v2048
        %v2072 = vpop.xlane.xlu0 %2071
        %2073 = vadd.xlane.f32.xlu0 %v2049
        %v2074 = vpop.xlane.xlu0 %2073
        %2075 = vadd.xlane.f32.xlu0 %v2050
        %v2076 = vpop.xlane.xlu0 %2075
        %2077 = vadd.xlane.f32.xlu0 %v2051
        %v2078 = vpop.xlane.xlu0 %2077
        %2079 = vadd.xlane.f32.xlu0 %v2052
        %v2080 = vpop.xlane.xlu0 %2079
        %2081 = vadd.xlane.f32.xlu0 %v2053
        %v2082 = vpop.xlane.xlu0 %2081
        %2083 = vadd.xlane.f32.xlu0 %v2054
        %v2084 = vpop.xlane.xlu0 %2083
        %2085 = vadd.xlane.f32.xlu0 %v2055
        %v2086 = vpop.xlane.xlu0 %2085
        %2087 = vadd.xlane.f32.xlu0 %v2056
        %v2088 = vpop.xlane.xlu0 %2087
        %v2089 = vadd.f32 %v1994, %v2058
        %v2090 = vadd.f32 %v1996, %v2060
        %v2091 = vadd.f32 %v1998, %v2062
        %v2092 = vadd.f32 %v2000, %v2064
        %v2093 = vadd.f32 %v2002, %v2066
        %v2094 = vadd.f32 %v2004, %v2068
        %v2095 = vadd.f32 %v2006, %v2070
        %v2096 = vadd.f32 %v2008, %v2072
        %v2097 = vadd.f32 %v2010, %v2074
        %v2098 = vadd.f32 %v2012, %v2076
        %v2099 = vadd.f32 %v2014, %v2078
        %v2100 = vadd.f32 %v2016, %v2080
        %v2101 = vadd.f32 %v2018, %v2082
        %v2102 = vadd.f32 %v2020, %v2084
        %v2103 = vadd.f32 %v2022, %v2086
        %v2104 = vadd.f32 %v2024, %v2088
        %v2105 = vmul.f32 %v899, %v422
        %v2106 = vmul.f32 %v900, %v422
        %v2107 = vmul.f32 %v901, %v422
        %v2108 = vmul.f32 %v902, %v422
        %v2109 = vmul.f32 %v903, %v422
        %v2110 = vmul.f32 %v904, %v422
        %v2111 = vmul.f32 %v905, %v422
        %v2112 = vmul.f32 %v906, %v422
        %v2113 = vmul.f32 %v907, %v422
        %v2114 = vmul.f32 %v908, %v422
        %v2115 = vmul.f32 %v909, %v422
        %v2116 = vmul.f32 %v910, %v422
        %v2117 = vmul.f32 %v911, %v422
        %v2118 = vmul.f32 %v912, %v422
        %v2119 = vmul.f32 %v913, %v422
        %v2120 = vmul.f32 %v914, %v422
        %2121 = vadd.xlane.f32.xlu0 %v2105
        %v2122 = vpop.xlane.xlu0 %2121
        %2123 = vadd.xlane.f32.xlu0 %v2106
        %v2124 = vpop.xlane.xlu0 %2123
        %2125 = vadd.xlane.f32.xlu0 %v2107
        %v2126 = vpop.xlane.xlu0 %2125
        %2127 = vadd.xlane.f32.xlu0 %v2108
        %v2128 = vpop.xlane.xlu0 %2127
        %2129 = vadd.xlane.f32.xlu0 %v2109
        %v2130 = vpop.xlane.xlu0 %2129
        %2131 = vadd.xlane.f32.xlu0 %v2110
        %v2132 = vpop.xlane.xlu0 %2131
        %2133 = vadd.xlane.f32.xlu0 %v2111
        %v2134 = vpop.xlane.xlu0 %2133
        %2135 = vadd.xlane.f32.xlu0 %v2112
        %v2136 = vpop.xlane.xlu0 %2135
        %2137 = vadd.xlane.f32.xlu0 %v2113
        %v2138 = vpop.xlane.xlu0 %2137
        %2139 = vadd.xlane.f32.xlu0 %v2114
        %v2140 = vpop.xlane.xlu0 %2139
        %2141 = vadd.xlane.f32.xlu0 %v2115
        %v2142 = vpop.xlane.xlu0 %2141
        %2143 = vadd.xlane.f32.xlu0 %v2116
        %v2144 = vpop.xlane.xlu0 %2143
        %2145 = vadd.xlane.f32.xlu0 %v2117
        %v2146 = vpop.xlane.xlu0 %2145
        %2147 = vadd.xlane.f32.xlu0 %v2118
        %v2148 = vpop.xlane.xlu0 %2147
        %2149 = vadd.xlane.f32.xlu0 %v2119
        %v2150 = vpop.xlane.xlu0 %2149
        %2151 = vadd.xlane.f32.xlu0 %v2120
        %v2152 = vpop.xlane.xlu0 %2151
        %v2153 = vadd.f32 %v2089, %v2122
        %v2154 = vadd.f32 %v2090, %v2124
        %v2155 = vadd.f32 %v2091, %v2126
        %v2156 = vadd.f32 %v2092, %v2128
        %v2157 = vadd.f32 %v2093, %v2130
        %v2158 = vadd.f32 %v2094, %v2132
        %v2159 = vadd.f32 %v2095, %v2134
        %v2160 = vadd.f32 %v2096, %v2136
        %v2161 = vadd.f32 %v2097, %v2138
        %v2162 = vadd.f32 %v2098, %v2140
        %v2163 = vadd.f32 %v2099, %v2142
        %v2164 = vadd.f32 %v2100, %v2144
        %v2165 = vadd.f32 %v2101, %v2146
        %v2166 = vadd.f32 %v2102, %v2148
        %v2167 = vadd.f32 %v2103, %v2150
        %v2168 = vadd.f32 %v2104, %v2152
        %v2169 = vmul.f32 %v275, %v1811
        %v2170 = vmul.f32 %v275, %v1815
        %v2171 = vmul.f32 %v275, %v1819
        %v2172 = vmul.f32 %v275, %v1823
        %v2173 = vmul.f32 %v275, %v1827
        %v2174 = vmul.f32 %v275, %v1831
        %v2175 = vmul.f32 %v275, %v1835
        %v2176 = vmul.f32 %v275, %v1839
        %v2177 = vmul.f32 %v275, %v1843
        %v2178 = vmul.f32 %v275, %v1847
        %v2179 = vmul.f32 %v275, %v1851
        %v2180 = vmul.f32 %v275, %v1855
        %v2181 = vmul.f32 %v275, %v1859
        %v2182 = vmul.f32 %v275, %v1863
        %v2183 = vmul.f32 %v275, %v1867
        %v2184 = vmul.f32 %v275, %v1871
        %2185 = vadd.xlane.f32.xlu0 %v2169
        %v2186 = vpop.xlane.xlu0 %2185
        %2187 = vadd.xlane.f32.xlu0 %v2170
        %v2188 = vpop.xlane.xlu0 %2187
        %2189 = vadd.xlane.f32.xlu0 %v2171
        %v2190 = vpop.xlane.xlu0 %2189
        %2191 = vadd.xlane.f32.xlu0 %v2172
        %v2192 = vpop.xlane.xlu0 %2191
        %2193 = vadd.xlane.f32.xlu0 %v2173
        %v2194 = vpop.xlane.xlu0 %2193
        %2195 = vadd.xlane.f32.xlu0 %v2174
        %v2196 = vpop.xlane.xlu0 %2195
        %2197 = vadd.xlane.f32.xlu0 %v2175
        %v2198 = vpop.xlane.xlu0 %2197
        %2199 = vadd.xlane.f32.xlu0 %v2176
        %v2200 = vpop.xlane.xlu0 %2199
        %2201 = vadd.xlane.f32.xlu0 %v2177
        %v2202 = vpop.xlane.xlu0 %2201
        %2203 = vadd.xlane.f32.xlu0 %v2178
        %v2204 = vpop.xlane.xlu0 %2203
        %2205 = vadd.xlane.f32.xlu0 %v2179
        %v2206 = vpop.xlane.xlu0 %2205
        %2207 = vadd.xlane.f32.xlu0 %v2180
        %v2208 = vpop.xlane.xlu0 %2207
        %2209 = vadd.xlane.f32.xlu0 %v2181
        %v2210 = vpop.xlane.xlu0 %2209
        %2211 = vadd.xlane.f32.xlu0 %v2182
        %v2212 = vpop.xlane.xlu0 %2211
        %2213 = vadd.xlane.f32.xlu0 %v2183
        %v2214 = vpop.xlane.xlu0 %2213
        %2215 = vadd.xlane.f32.xlu0 %v2184
        %v2216 = vpop.xlane.xlu0 %2215
        %v2217 = vadd.f32 %v2153, %v2186
        %v2218 = vadd.f32 %v2154, %v2188
        %v2219 = vadd.f32 %v2155, %v2190
        %v2220 = vadd.f32 %v2156, %v2192
        %v2221 = vadd.f32 %v2157, %v2194
        %v2222 = vadd.f32 %v2158, %v2196
        %v2223 = vadd.f32 %v2159, %v2198
        %v2224 = vadd.f32 %v2160, %v2200
        %v2225 = vadd.f32 %v2161, %v2202
        %v2226 = vadd.f32 %v2162, %v2204
        %v2227 = vadd.f32 %v2163, %v2206
        %v2228 = vadd.f32 %v2164, %v2208
        %v2229 = vadd.f32 %v2165, %v2210
        %v2230 = vadd.f32 %v2166, %v2212
        %v2231 = vadd.f32 %v2167, %v2214
        %v2232 = vadd.f32 %v2168, %v2216
        %v2233 = vadd.f32 %v2217, %v1959
        %v2234 = vadd.f32 %v2218, %v1959
        %v2235 = vadd.f32 %v2219, %v1959
        %v2236 = vadd.f32 %v2220, %v1959
        %v2237 = vadd.f32 %v2221, %v1959
        %v2238 = vadd.f32 %v2222, %v1959
        %v2239 = vadd.f32 %v2223, %v1959
        %v2240 = vadd.f32 %v2224, %v1959
        %v2241 = vadd.f32 %v2225, %v1959
        %v2242 = vadd.f32 %v2226, %v1959
        %v2243 = vadd.f32 %v2227, %v1959
        %v2244 = vadd.f32 %v2228, %v1959
        %v2245 = vadd.f32 %v2229, %v1959
        %v2246 = vadd.f32 %v2230, %v1959
        %v2247 = vadd.f32 %v2231, %v1959
        %v2248 = vadd.f32 %v2232, %v1959
        %2265 = vset.pattern.permute.xlu0 0
        %2266 = vperm.xlu0 %2265, %v1961
        %v2267 = vpop.permute.xlu0 %2266
        %2268 = vset.pattern.permute.xlu0 0
        %2269 = vperm.xlu0 %2268, %v1962
        %v2270 = vpop.permute.xlu0 %2269
        %2271 = vset.pattern.permute.xlu0 0
        %2272 = vperm.xlu0 %2271, %v1963
        %v2273 = vpop.permute.xlu0 %2272
        %2274 = vset.pattern.permute.xlu0 0
        %2275 = vperm.xlu0 %2274, %v1964
        %v2276 = vpop.permute.xlu0 %2275
        %2277 = vset.pattern.permute.xlu0 0
        %2278 = vperm.xlu0 %2277, %v1965
        %v2279 = vpop.permute.xlu0 %2278
        %2280 = vset.pattern.permute.xlu0 0
        %2281 = vperm.xlu0 %2280, %v1966
        %v2282 = vpop.permute.xlu0 %2281
        %2283 = vset.pattern.permute.xlu0 0
        %2284 = vperm.xlu0 %2283, %v1967
        %v2285 = vpop.permute.xlu0 %2284
        %2286 = vset.pattern.permute.xlu0 0
        %2287 = vperm.xlu0 %2286, %v1968
        %v2288 = vpop.permute.xlu0 %2287
        %2289 = vset.pattern.permute.xlu0 0
        %2290 = vperm.xlu0 %2289, %v1969
        %v2291 = vpop.permute.xlu0 %2290
        %2292 = vset.pattern.permute.xlu0 0
        %2293 = vperm.xlu0 %2292, %v1970
        %v2294 = vpop.permute.xlu0 %2293
        %2295 = vset.pattern.permute.xlu0 0
        %2296 = vperm.xlu0 %2295, %v1971
        %v2297 = vpop.permute.xlu0 %2296
        %2298 = vset.pattern.permute.xlu0 0
        %2299 = vperm.xlu0 %2298, %v1972
        %v2300 = vpop.permute.xlu0 %2299
        %2301 = vset.pattern.permute.xlu0 0
        %2302 = vperm.xlu0 %2301, %v1973
        %v2303 = vpop.permute.xlu0 %2302
        %2304 = vset.pattern.permute.xlu0 0
        %2305 = vperm.xlu0 %2304, %v1974
        %v2306 = vpop.permute.xlu0 %2305
        %2307 = vset.pattern.permute.xlu0 0
        %2308 = vperm.xlu0 %2307, %v1975
        %v2309 = vpop.permute.xlu0 %2308
        %2310 = vset.pattern.permute.xlu0 0
        %2311 = vperm.xlu0 %2310, %v1976
        %v2312 = vpop.permute.xlu0 %2311
        %v2313 = vlaneseq
        %v2314 = vand.u32 %v2313, 127
        %v2315 = vlaneseq
        %v2316 = vshrl.u32 %v2315, 7
        %v2317 = vsub.s32 %v2314, %v2316
        %v2318 = vrot.slane %v2267, %v2317
        %v2319 = vlaneseq
        %v2320 = vshrl.u32 %v2319, 7
        %v2321 = vsub.s32 %v2314, %v2320
        %v2322 = vrot.slane %v2270, %v2321
        %v2323 = vlaneseq
        %v2324 = vshrl.u32 %v2323, 7
        %v2325 = vsub.s32 %v2314, %v2324
        %v2326 = vrot.slane %v2273, %v2325
        %v2327 = vlaneseq
        %v2328 = vshrl.u32 %v2327, 7
        %v2329 = vsub.s32 %v2314, %v2328
        %v2330 = vrot.slane %v2276, %v2329
        %v2331 = vlaneseq
        %v2332 = vshrl.u32 %v2331, 7
        %v2333 = vsub.s32 %v2314, %v2332
        %v2334 = vrot.slane %v2279, %v2333
        %v2335 = vlaneseq
        %v2336 = vshrl.u32 %v2335, 7
        %v2337 = vsub.s32 %v2314, %v2336
        %v2338 = vrot.slane %v2282, %v2337
        %v2339 = vlaneseq
        %v2340 = vshrl.u32 %v2339, 7
        %v2341 = vsub.s32 %v2314, %v2340
        %v2342 = vrot.slane %v2285, %v2341
        %v2343 = vlaneseq
        %v2344 = vshrl.u32 %v2343, 7
        %v2345 = vsub.s32 %v2314, %v2344
        %v2346 = vrot.slane %v2288, %v2345
        %v2347 = vlaneseq
        %v2348 = vshrl.u32 %v2347, 7
        %v2349 = vsub.s32 %v2314, %v2348
        %v2350 = vrot.slane %v2291, %v2349
        %v2351 = vlaneseq
        %v2352 = vshrl.u32 %v2351, 7
        %v2353 = vsub.s32 %v2314, %v2352
        %v2354 = vrot.slane %v2294, %v2353
        %v2355 = vlaneseq
        %v2356 = vshrl.u32 %v2355, 7
        %v2357 = vsub.s32 %v2314, %v2356
        %v2358 = vrot.slane %v2297, %v2357
        %v2359 = vlaneseq
        %v2360 = vshrl.u32 %v2359, 7
        %v2361 = vsub.s32 %v2314, %v2360
        %v2362 = vrot.slane %v2300, %v2361
        %v2363 = vlaneseq
        %v2364 = vshrl.u32 %v2363, 7
        %v2365 = vsub.s32 %v2314, %v2364
        %v2366 = vrot.slane %v2303, %v2365
        %v2367 = vlaneseq
        %v2368 = vshrl.u32 %v2367, 7
        %v2369 = vsub.s32 %v2314, %v2368
        %v2370 = vrot.slane %v2306, %v2369
        %v2371 = vlaneseq
        %v2372 = vshrl.u32 %v2371, 7
        %v2373 = vsub.s32 %v2314, %v2372
        %v2374 = vrot.slane %v2309, %v2373
        %v2375 = vlaneseq
        %v2376 = vshrl.u32 %v2375, 7
        %v2377 = vsub.s32 %v2314, %v2376
        %v2378 = vrot.slane %v2312, %v2377
        %vm2379 = vcmask 1041409
        %v2380 = vsel %vm2379, %v2322, %v2318
        %vm2381 = vcmask 1042434
        %v2382 = vsel %vm2381, %v2326, %v2380
        %vm2383 = vcmask 1043459
        %v2384 = vsel %vm2383, %v2330, %v2382
        %vm2385 = vcmask 1044484
        %v2386 = vsel %vm2385, %v2334, %v2384
        %vm2387 = vcmask 1045509
        %v2388 = vsel %vm2387, %v2338, %v2386
        %vm2389 = vcmask 1046534
        %v2390 = vsel %vm2389, %v2342, %v2388
        %vm2391 = vcmask 1047559
        %v2392 = vsel %vm2391, %v2346, %v2390
        %v2393 = vsel %vm2379, %v2354, %v2350
        %v2394 = vsel %vm2381, %v2358, %v2393
        %v2395 = vsel %vm2383, %v2362, %v2394
        %v2396 = vsel %vm2385, %v2366, %v2395
        %v2397 = vsel %vm2387, %v2370, %v2396
        %v2398 = vsel %vm2389, %v2374, %v2397
        %v2399 = vsel %vm2391, %v2378, %v2398
        %vm2402 = vcmask 64512
        %2403 = vst.msk [vmem:[%s263] sm:$0xff] %vm2402, %v2392
        %2404 = vst.msk [vmem:[%s263 + $0x8] sm:$0xff] %vm2402, %v2399
        %2421 = vset.pattern.permute.xlu0 0
        %2422 = vperm.xlu0 %2421, %v2233
        %v2423 = vpop.permute.xlu0 %2422
        %2424 = vset.pattern.permute.xlu0 0
        %2425 = vperm.xlu0 %2424, %v2234
        %v2426 = vpop.permute.xlu0 %2425
        %2427 = vset.pattern.permute.xlu0 0
        %2428 = vperm.xlu0 %2427, %v2235
        %v2429 = vpop.permute.xlu0 %2428
        %2430 = vset.pattern.permute.xlu0 0
        %2431 = vperm.xlu0 %2430, %v2236
        %v2432 = vpop.permute.xlu0 %2431
        %2433 = vset.pattern.permute.xlu0 0
        %2434 = vperm.xlu0 %2433, %v2237
        %v2435 = vpop.permute.xlu0 %2434
        %2436 = vset.pattern.permute.xlu0 0
        %2437 = vperm.xlu0 %2436, %v2238
        %v2438 = vpop.permute.xlu0 %2437
        %2439 = vset.pattern.permute.xlu0 0
        %2440 = vperm.xlu0 %2439, %v2239
        %v2441 = vpop.permute.xlu0 %2440
        %2442 = vset.pattern.permute.xlu0 0
        %2443 = vperm.xlu0 %2442, %v2240
        %v2444 = vpop.permute.xlu0 %2443
        %2445 = vset.pattern.permute.xlu0 0
        %2446 = vperm.xlu0 %2445, %v2241
        %v2447 = vpop.permute.xlu0 %2446
        %2448 = vset.pattern.permute.xlu0 0
        %2449 = vperm.xlu0 %2448, %v2242
        %v2450 = vpop.permute.xlu0 %2449
        %2451 = vset.pattern.permute.xlu0 0
        %2452 = vperm.xlu0 %2451, %v2243
        %v2453 = vpop.permute.xlu0 %2452
        %2454 = vset.pattern.permute.xlu0 0
        %2455 = vperm.xlu0 %2454, %v2244
        %v2456 = vpop.permute.xlu0 %2455
        %2457 = vset.pattern.permute.xlu0 0
        %2458 = vperm.xlu0 %2457, %v2245
        %v2459 = vpop.permute.xlu0 %2458
        %2460 = vset.pattern.permute.xlu0 0
        %2461 = vperm.xlu0 %2460, %v2246
        %v2462 = vpop.permute.xlu0 %2461
        %2463 = vset.pattern.permute.xlu0 0
        %2464 = vperm.xlu0 %2463, %v2247
        %v2465 = vpop.permute.xlu0 %2464
        %2466 = vset.pattern.permute.xlu0 0
        %2467 = vperm.xlu0 %2466, %v2248
        %v2468 = vpop.permute.xlu0 %2467
        %v2469 = vadd.s32 %v2314, 4294967288
        %v2470 = vlaneseq
        %v2471 = vshrl.u32 %v2470, 7
        %v2472 = vsub.s32 %v2469, %v2471
        %v2473 = vrot.slane %v2423, %v2472
        %v2474 = vlaneseq
        %v2475 = vshrl.u32 %v2474, 7
        %v2476 = vsub.s32 %v2469, %v2475
        %v2477 = vrot.slane %v2426, %v2476
        %v2478 = vlaneseq
        %v2479 = vshrl.u32 %v2478, 7
        %v2480 = vsub.s32 %v2469, %v2479
        %v2481 = vrot.slane %v2429, %v2480
        %v2482 = vlaneseq
        %v2483 = vshrl.u32 %v2482, 7
        %v2484 = vsub.s32 %v2469, %v2483
        %v2485 = vrot.slane %v2432, %v2484
        %v2486 = vlaneseq
        %v2487 = vshrl.u32 %v2486, 7
        %v2488 = vsub.s32 %v2469, %v2487
        %v2489 = vrot.slane %v2435, %v2488
        %v2490 = vlaneseq
        %v2491 = vshrl.u32 %v2490, 7
        %v2492 = vsub.s32 %v2469, %v2491
        %v2493 = vrot.slane %v2438, %v2492
        %v2494 = vlaneseq
        %v2495 = vshrl.u32 %v2494, 7
        %v2496 = vsub.s32 %v2469, %v2495
        %v2497 = vrot.slane %v2441, %v2496
        %v2498 = vlaneseq
        %v2499 = vshrl.u32 %v2498, 7
        %v2500 = vsub.s32 %v2469, %v2499
        %v2501 = vrot.slane %v2444, %v2500
        %v2502 = vlaneseq
        %v2503 = vshrl.u32 %v2502, 7
        %v2504 = vsub.s32 %v2469, %v2503
        %v2505 = vrot.slane %v2447, %v2504
        %v2506 = vlaneseq
        %v2507 = vshrl.u32 %v2506, 7
        %v2508 = vsub.s32 %v2469, %v2507
        %v2509 = vrot.slane %v2450, %v2508
        %v2510 = vlaneseq
        %v2511 = vshrl.u32 %v2510, 7
        %v2512 = vsub.s32 %v2469, %v2511
        %v2513 = vrot.slane %v2453, %v2512
        %v2514 = vlaneseq
        %v2515 = vshrl.u32 %v2514, 7
        %v2516 = vsub.s32 %v2469, %v2515
        %v2517 = vrot.slane %v2456, %v2516
        %v2518 = vlaneseq
        %v2519 = vshrl.u32 %v2518, 7
        %v2520 = vsub.s32 %v2469, %v2519
        %v2521 = vrot.slane %v2459, %v2520
        %v2522 = vlaneseq
        %v2523 = vshrl.u32 %v2522, 7
        %v2524 = vsub.s32 %v2469, %v2523
        %v2525 = vrot.slane %v2462, %v2524
        %v2526 = vlaneseq
        %v2527 = vshrl.u32 %v2526, 7
        %v2528 = vsub.s32 %v2469, %v2527
        %v2529 = vrot.slane %v2465, %v2528
        %v2530 = vlaneseq
        %v2531 = vshrl.u32 %v2530, 7
        %v2532 = vsub.s32 %v2469, %v2531
        %v2533 = vrot.slane %v2468, %v2532
        %v2534 = vsel %vm2379, %v2477, %v2473
        %v2535 = vsel %vm2381, %v2481, %v2534
        %v2536 = vsel %vm2383, %v2485, %v2535
        %v2537 = vsel %vm2385, %v2489, %v2536
        %v2538 = vsel %vm2387, %v2493, %v2537
        %v2539 = vsel %vm2389, %v2497, %v2538
        %v2540 = vsel %vm2391, %v2501, %v2539
        %v2541 = vsel %vm2379, %v2509, %v2505
        %v2542 = vsel %vm2381, %v2513, %v2541
        %v2543 = vsel %vm2383, %v2517, %v2542
        %v2544 = vsel %vm2385, %v2521, %v2543
        %v2545 = vsel %vm2387, %v2525, %v2544
        %v2546 = vsel %vm2389, %v2529, %v2545
        %v2547 = vsel %vm2391, %v2533, %v2546
        %vm2550 = vcmask 130112
        %2551 = vst.msk [vmem:[%s263] sm:$0xff] %vm2550, %v2540
        %2552 = vst.msk [vmem:[%s263 + $0x8] sm:$0xff] %vm2550, %v2547
        %s2553 = smul.u32 2, %s20
        %p2554 = scmp.lt.s32.totalorder %s2553, 3
        %s2555 = scalar_select %p2554, %s2553, 3
        %s2556 = smul.addr %s2555, 8
        %s2557 = scalar_lea.vmem %s4, %s2556
        // Predicated region
        $region53: #{tpu_custom_call.1} parent=35 // pred_check
          %p2558 = pneg %p127
        $region54: #{tpu_custom_call.1} parent=35 // pred_check_branch
          %2560 = sbr.rel (%p2558) target = $region56
        $region55: #{tpu_custom_call.1} parent=35 // pred_region
          %s2561 = smul.u32 2, %s20
        $region56: #{tpu_custom_call.1} parent=35 // pred_fallthru
          _
      $region36: #{tpu_custom_call.1} parent=5 // pred_fallthru
        _
      %p2562 = scmp.le.s32.totalorder 2, %s15
      // Predicated region
      $region57: #{tpu_custom_call.1} parent=5 // pred_check
        %p2563 = pneg %p2562
      $region58: #{tpu_custom_call.1} parent=5 // pred_check_branch
        %2565 = sbr.rel (%p2563) target = $region60
      $region59: #{tpu_custom_call.1} parent=5 // pred_region
        %s2566 = ssub.s32 %s15, 2
        // Predicated region
        $region61: #{tpu_custom_call.1} parent=59 // pred_check
          %p2567 = pneg %p133
        $region62: #{tpu_custom_call.1} parent=59 // pred_check_branch
          %2569 = sbr.rel (%p2567) target = $region64
        $region63: #{tpu_custom_call.1} parent=59 // pred_region
          %s2570 = smul.u32 2, %s21
          %p2571 = scmp.lt.s32.totalorder %s2570, 3
          %s2572 = scalar_select %p2571, %s2570, 3
          %s2573 = smul.addr %s2572, 8
          %s2574 = scalar_lea.vmem %s4, %s2573
        $region64: #{tpu_custom_call.1} parent=59 // pred_fallthru
          _
      $region60: #{tpu_custom_call.1} parent=5 // pred_fallthru
        _
    $region6: #{tpu_custom_call.1} parent=1 // loop_footer
      %s19 = sadd.s32 1, %s15
    $region7: #{tpu_custom_call.1} parent=1 // loop_footer_branch
      %14 = sbr.rel target = $region3
    $region8: #{tpu_custom_call.1} parent=1 // loop_exit
      _
    %2575 = vsyncpa [#allocation3], 1
    %s2576 = scalar_lea.sflag [#allocation3], 1
    %2577 = vsyncpa %s2576, 1
    %2578 = vsyncpa [#allocation5], 1
    %2579 = vsyncpa [#allocation8], 1

</llo_original>
